<compile_context>
chip_gen: v5e
topology: v5e:2x2
jax: 0.10.0
libtpu: 0.0.40
codegen_flags: <defaults>
</compile_context>

<pallas_src>
import functools

import jax
import jax.numpy as jnp
from jax.experimental import pallas as pl
from jax.experimental.pallas import tpu as pltpu

_BN_EPS = 1e-5
_VMEM_LIMIT = 32 * 1024 * 1024   # explicit scoped-VMEM ceiling (v5e default is 16 MiB)
_MAX_TM = 512                    # row-tile size: multiple of 8, safe on v7x VMEM


def _round_up(x, m):
    return (x + m - 1) // m * m


def _tile_rows(m):
    tm = min(_MAX_TM, _round_up(m, 8))
    mp = _round_up(m, tm)
    return tm, mp


# ---------------------------------------------------------------------------
# In-kernel helpers
# ---------------------------------------------------------------------------
def _bn_relu(y, s1, s2, gamma, beta, inv_m):
    mean = s1 * inv_m
    var = jnp.maximum(s2 * inv_m - mean * mean, 0.0)       # biased variance
    inv_std = jax.lax.rsqrt(var + _BN_EPS)
    return jnp.maximum((y - mean) * (inv_std * gamma) + beta, 0.0)


def _accumulate_stats(i, y, s1_ref, s2_ref, tm, m_rows, masked):
    @pl.when(i == 0)
    def _():
        s1_ref[...] = jnp.zeros_like(s1_ref)
        s2_ref[...] = jnp.zeros_like(s2_ref)

    if masked:  # static branch: only when rows were zero-padded to a tile multiple
        row = i * tm + jax.lax.broadcasted_iota(jnp.int32, (tm, 1), 0)
        valid = (row < m_rows).astype(jnp.float32)
        y = y * valid
    s1_ref[...] += jnp.sum(y, axis=0, keepdims=True)
    s2_ref[...] += jnp.sum(y * y, axis=0, keepdims=True)


# ---------------------------------------------------------------------------
# Kernels
# ---------------------------------------------------------------------------
def _matmul_stats_kernel(x_ref, w_ref, y_ref, s1_ref, s2_ref, *, tm, m_rows, masked):
    # y = x @ W (bias dropped: cancelled by BN); accumulate per-channel sum/sumsq.
    i = pl.program_id(0)
    y = jnp.dot(x_ref[...].astype(jnp.bfloat16), w_ref[...],
                preferred_element_type=jnp.float32)
    y_ref[...] = y
    _accumulate_stats(i, y, s1_ref, s2_ref, tm, m_rows, masked)


def _bnrelu_matmul_stats_kernel(yp_ref, s1p_ref, s2p_ref, g_ref, b_ref, w_ref,
                                y_ref, s1_ref, s2_ref, *, tm, m_rows, masked):
    # Normalize+ReLU previous layer (exact batch stats), fuse next layer matmul.
    i = pl.program_id(0)
    h = _bn_relu(yp_ref[...], s1p_ref[...], s2p_ref[...], g_ref[...], b_ref[...],
                 1.0 / m_rows)
    y = jnp.dot(h.astype(jnp.bfloat16), w_ref[...],
                preferred_element_type=jnp.float32)
    y_ref[...] = y
    _accumulate_stats(i, y, s1_ref, s2_ref, tm, m_rows, masked)


def _bnrelu_kernel(y_ref, s1_ref, s2_ref, g_ref, b_ref, o_ref, *, m_rows):
    o_ref[...] = _bn_relu(y_ref[...], s1_ref[...], s2_ref[...], g_ref[...],
                          b_ref[...], 1.0 / m_rows)


def _bnrelu_linear_kernel(y_ref, s1_ref, s2_ref, g_ref, b_ref, w_ref, bias_ref,
                          o_ref, *, m_rows):
    h = _bn_relu(y_ref[...], s1_ref[...], s2_ref[...], g_ref[...], b_ref[...],
                 1.0 / m_rows)
    o_ref[...] = jnp.dot(h.astype(jnp.bfloat16), w_ref[...],
                         preferred_element_type=jnp.float32) + bias_ref[...]


# ---------------------------------------------------------------------------
# pallas_call wrappers
# ---------------------------------------------------------------------------
def _row_spec(tm, c):
    return pl.BlockSpec((tm, c), lambda i: (i, 0))


def _resident_spec(shape):
    return pl.BlockSpec(shape, lambda i: (0, 0))


def _matmul_cost(mp, cin, cout):
    return pl.CostEstimate(
        flops=2 * mp * cin * cout,
        transcendentals=cout,
        bytes_accessed=4 * (mp * cin + mp * cout) + 2 * cin * cout,
    )


def _call_matmul_stats(x, w, tm, m_rows, grid, masked):
    mp, cin = x.shape
    cout = w.shape[1]
    kernel = functools.partial(_matmul_stats_kernel, tm=tm, m_rows=m_rows,
                               masked=masked)
    return pl.pallas_call(
        kernel,
        grid=grid,
        in_specs=[_row_spec(tm, cin), _resident_spec((cin, cout))],
        out_specs=[_row_spec(tm, cout),
                   _resident_spec((1, cout)), _resident_spec((1, cout))],
        out_shape=[jax.ShapeDtypeStruct((mp, cout), jnp.float32),
                   jax.ShapeDtypeStruct((1, cout), jnp.float32),
                   jax.ShapeDtypeStruct((1, cout), jnp.float32)],
        compiler_params=pltpu.CompilerParams(
            dimension_semantics=("arbitrary",),
            vmem_limit_bytes=_VMEM_LIMIT),
        cost_estimate=_matmul_cost(mp, cin, cout),
    )(x, w)


def _call_bnrelu_matmul_stats(y, s1, s2, gamma, beta, w, tm, m_rows, grid, masked):
    mp, cin = y.shape
    cout = w.shape[1]
    kernel = functools.partial(_bnrelu_matmul_stats_kernel, tm=tm, m_rows=m_rows,
                               masked=masked)
    return pl.pallas_call(
        kernel,
        grid=grid,
        in_specs=[_row_spec(tm, cin),
                  _resident_spec((1, cin)), _resident_spec((1, cin)),
                  _resident_spec((1, cin)), _resident_spec((1, cin)),
                  _resident_spec((cin, cout))],
        out_specs=[_row_spec(tm, cout),
                   _resident_spec((1, cout)), _resident_spec((1, cout))],
        out_shape=[jax.ShapeDtypeStruct((mp, cout), jnp.float32),
                   jax.ShapeDtypeStruct((1, cout), jnp.float32),
                   jax.ShapeDtypeStruct((1, cout), jnp.float32)],
        compiler_params=pltpu.CompilerParams(
            dimension_semantics=("arbitrary",),
            vmem_limit_bytes=_VMEM_LIMIT),
        cost_estimate=_matmul_cost(mp, cin, cout),
    )(y, s1, s2, gamma, beta, w)


def _call_bnrelu(y, s1, s2, gamma, beta, tm, m_rows, grid):
    mp, c = y.shape
    kernel = functools.partial(_bnrelu_kernel, m_rows=m_rows)
    return pl.pallas_call(
        kernel,
        grid=grid,
        in_specs=[_row_spec(tm, c),
                  _resident_spec((1, c)), _resident_spec((1, c)),
                  _resident_spec((1, c)), _resident_spec((1, c))],
        out_specs=_row_spec(tm, c),
        out_shape=jax.ShapeDtypeStruct((mp, c), jnp.float32),
        compiler_params=pltpu.CompilerParams(
            dimension_semantics=("parallel",),
            vmem_limit_bytes=_VMEM_LIMIT),
    )(y, s1, s2, gamma, beta)


def _call_bnrelu_linear(y, s1, s2, gamma, beta, w, bias, tm, m_rows, grid):
    mp, cin = y.shape
    cout = w.shape[1]
    kernel = functools.partial(_bnrelu_linear_kernel, m_rows=m_rows)
    return pl.pallas_call(
        kernel,
        grid=grid,
        in_specs=[_row_spec(tm, cin),
                  _resident_spec((1, cin)), _resident_spec((1, cin)),
                  _resident_spec((1, cin)), _resident_spec((1, cin)),
                  _resident_spec((cin, cout)), _resident_spec((1, cout))],
        out_specs=_row_spec(tm, cout),
        out_shape=jax.ShapeDtypeStruct((mp, cout), jnp.float32),
        compiler_params=pltpu.CompilerParams(
            dimension_semantics=("parallel",),
            vmem_limit_bytes=_VMEM_LIMIT),
        cost_estimate=_matmul_cost(mp, cin, cout),
    )(y, s1, s2, gamma, beta, w, bias)


def _encoder_rows(h, layers, final):
    """Run Linear(+BN+ReLU)* [+ final Linear] on a (M, C) row slab."""
    m_rows = h.shape[0]
    tm, mp = _tile_rows(m_rows)
    masked = mp != m_rows
    if masked:
        h = jnp.pad(h, ((0, mp - m_rows), (0, 0)))
    grid = (mp // tm,)

    w0, gamma, beta = layers[0]
    y, s1, s2 = _call_matmul_stats(h, w0, tm, m_rows, grid, masked)
    for (w, g, b) in layers[1:]:
        y, s1n, s2n = _call_bnrelu_matmul_stats(
            y, s1, s2, gamma, beta, w, tm, m_rows, grid, masked)
        s1, s2, gamma, beta = s1n, s2n, g, b
    if final is not None:
        wf, bf = final
        out = _call_bnrelu_linear(y, s1, s2, gamma, beta, wf, bf, tm, m_rows, grid)
    else:
        out = _call_bnrelu(y, s1, s2, gamma, beta, tm, m_rows, grid)
    return out[:m_rows]


# ---------------------------------------------------------------------------
# Module-equivalent containers
# ---------------------------------------------------------------------------
class PallasPointNetEncoder:
    """nn.Linear + nn.BatchNorm1d(training) + ReLU stack, optional final Linear."""

    def __init__(self, cs, linear_out=None, key=None):
        if key is None:
            key = jax.random.PRNGKey(0)
        self.layers = []   # (w_bf16 (Cin,Cout), gamma (1,Cout), beta (1,Cout))
        for i in range(1, len(cs)):
            cin, cout = cs[i - 1], cs[i]
            key, kw = jax.random.split(key)
            bound = 1.0 / float(cin) ** 0.5
            w = jax.random.uniform(kw, (cout, cin), jnp.float32, -bound, bound)
            # Linear bias omitted: exactly cancelled by BN mean subtraction.
            gamma = jnp.ones((1, cout), jnp.float32)   # BN weight init = 1
            beta = jnp.zeros((1, cout), jnp.float32)   # BN bias init = 0
            self.layers.append((w.T.astype(jnp.bfloat16), gamma, beta))
        self.final = None
        if linear_out is not None:
            cin = cs[-1]
            key, kw, kb = jax.random.split(key, 3)
            bound = 1.0 / float(cin) ** 0.5
            w = jax.random.uniform(kw, (linear_out, cin), jnp.float32, -bound, bound)
            b = jax.random.uniform(kb, (linear_out,), jnp.float32, -bound, bound)
            self.final = (w.T.astype(jnp.bfloat16), b.reshape(1, linear_out))

    def __call__(self, x):
        b, n, c = x.shape
        h = x.reshape(b * n, c).astype(jnp.float32)
        out = _encoder_rows(h, self.layers, self.final)
        return out.reshape(b, n, out.shape[-1])


class PallasPointNetModule:
    def __init__(self, cs_en, cs_dec, num_classes=20, key=None):
        if key is None:
            key = jax.random.PRNGKey(0)
        k1, k2 = jax.random.split(key)
        self.enc = PallasPointNetEncoder(cs_en, key=k1)
        self.dec = PallasPointNetEncoder(cs_dec, linear_out=num_classes, key=k2)

    def __call__(self, x):
        point_feats = self.enc(x)                                   # (B,N,Ce)
        global_feats = jnp.max(point_feats, axis=1, keepdims=True)  # (B,1,Ce)
        global_feats = jnp.broadcast_to(global_feats, point_feats.shape)
        joint_feats = jnp.concatenate([point_feats, global_feats], axis=2)
        return self.dec(joint_feats)


class PallasPointNetFull:
    def __init__(self, cs_en, cs_dec, cs_t_en, cs_t_dec, key=None):
        if key is None:
            key = jax.random.PRNGKey(0)
        k1, k2, k3 = jax.random.split(key, 3)
        self.t_enc = PallasPointNetEncoder(cs_t_en, key=k1)
        self.t_dec = PallasPointNetEncoder(cs_t_dec, linear_out=9, key=k2)
        self.joint_enc = PallasPointNetModule(cs_en, cs_dec, key=k3)

    def __call__(self, x):
        b, n, c = x.shape
        t_feats = self.t_enc(x)                    # (B,N,Ct)
        t_feats = jnp.max(t_feats, axis=1)         # (B,Ct) global max-pool
        t_feats = t_feats.reshape(b, 1, -1)
        t_feats = self.t_dec(t_feats)              # (B,1,9)
        point_trans = t_feats.reshape(b, 3, 3) + jnp.eye(3, dtype=t_feats.dtype)
        # Tiny per-batch 3x3 transform (torch.bmm) kept as plain jnp glue.
        transformed = jnp.einsum("bnc,bcd->bnd", x, point_trans)
        return self.joint_enc(transformed)


if __name__ == "__main__":
    # Small shapes consistent with forward(): x is (B, N, 3); points must be
    # 3-D because of the learned 3x3 transform.
    cs_t_en = [3, 32, 64]
    cs_t_dec = [64, 32]          # cs_t_dec[0] == cs_t_en[-1]
    cs_en = [3, 32, 64]
    cs_dec = [128, 64]           # cs_dec[0] == 2 * cs_en[-1]
    B, N, C = 2, 16, 3

    key = jax.random.PRNGKey(0)
    k_x, k_p = jax.random.split(key)
    x = jax.random.normal(k_x, (B, N, C), jnp.float32)

    model = PallasPointNetFull(cs_en, cs_dec, cs_t_en, cs_t_dec, key=k_p)
    fwd = jax.jit(lambda inp: model(inp))
    out = jax.block_until_ready(fwd(x))
    assert out.shape == (B, N, 20), out.shape
    assert bool(jnp.all(jnp.isfinite(out)))
    print("KERNEL_OK")
</pallas_src>

<mosaic_0001>
module attributes {stable_mosaic.version = 11 : i64} {
  func.func @_bnrelu_matmul_stats_kernel(%arg0: i32, %arg1: memref<32x32xf32, #tpu.memory_space<vmem>>, %arg2: memref<1x32xf32, #tpu.memory_space<vmem>>, %arg3: memref<1x32xf32, #tpu.memory_space<vmem>>, %arg4: memref<1x32xf32, #tpu.memory_space<vmem>>, %arg5: memref<1x32xf32, #tpu.memory_space<vmem>>, %arg6: memref<32x64xbf16, #tpu.memory_space<vmem>>, %arg7: memref<32x64xf32, #tpu.memory_space<vmem>>, %arg8: memref<1x64xf32, #tpu.memory_space<vmem>>, %arg9: memref<1x64xf32, #tpu.memory_space<vmem>>) attributes {dimension_semantics = [#tpu.dimension_semantics<arbitrary>], iteration_bounds = array<i64: 1>, scalar_prefetch = 0 : i64, scratch_operands = 0 : i64, tpu.core_type = #tpu.core_type<tc>, window_params = [{transform_indices = @transform_0, window_bounds = array<i64: 32, 32>}, {pipeline_mode = #tpu.pipeline_mode<synchronous>, transform_indices = @transform_1, window_bounds = array<i64: 1, 32>}, {pipeline_mode = #tpu.pipeline_mode<synchronous>, transform_indices = @transform_2, window_bounds = array<i64: 1, 32>}, {pipeline_mode = #tpu.pipeline_mode<synchronous>, transform_indices = @transform_3, window_bounds = array<i64: 1, 32>}, {pipeline_mode = #tpu.pipeline_mode<synchronous>, transform_indices = @transform_4, window_bounds = array<i64: 1, 32>}, {pipeline_mode = #tpu.pipeline_mode<synchronous>, transform_indices = @transform_5, window_bounds = array<i64: 32, 64>}, {transform_indices = @transform_6, window_bounds = array<i64: 32, 64>}, {pipeline_mode = #tpu.pipeline_mode<synchronous>, transform_indices = @transform_7, window_bounds = array<i64: 1, 64>}, {pipeline_mode = #tpu.pipeline_mode<synchronous>, transform_indices = @transform_8, window_bounds = array<i64: 1, 64>}]} {
    %c0 = arith.constant 0 : index
    %c0_0 = arith.constant 0 : index
    %0 = vector.load %arg1[%c0, %c0_0] : memref<32x32xf32, #tpu.memory_space<vmem>>, vector<32x32xf32>
    %c0_1 = arith.constant 0 : index
    %c0_2 = arith.constant 0 : index
    %1 = vector.load %arg2[%c0_1, %c0_2] : memref<1x32xf32, #tpu.memory_space<vmem>>, vector<1x32xf32>
    %c0_3 = arith.constant 0 : index
    %c0_4 = arith.constant 0 : index
    %2 = vector.load %arg3[%c0_3, %c0_4] : memref<1x32xf32, #tpu.memory_space<vmem>>, vector<1x32xf32>
    %c0_5 = arith.constant 0 : index
    %c0_6 = arith.constant 0 : index
    %3 = vector.load %arg4[%c0_5, %c0_6] : memref<1x32xf32, #tpu.memory_space<vmem>>, vector<1x32xf32>
    %c0_7 = arith.constant 0 : index
    %c0_8 = arith.constant 0 : index
    %4 = vector.load %arg5[%c0_7, %c0_8] : memref<1x32xf32, #tpu.memory_space<vmem>>, vector<1x32xf32>
    %cst = arith.constant 3.125000e-02 : f32
    %5 = vector.broadcast %cst : f32 to vector<1x32xf32>
    %6 = arith.mulf %1, %5 : vector<1x32xf32>
    %cst_9 = arith.constant 3.125000e-02 : f32
    %7 = vector.broadcast %cst_9 : f32 to vector<1x32xf32>
    %8 = arith.mulf %2, %7 : vector<1x32xf32>
    %9 = arith.mulf %6, %6 : vector<1x32xf32>
    %10 = arith.subf %8, %9 : vector<1x32xf32>
    %cst_10 = arith.constant 0.000000e+00 : f32
    %11 = vector.broadcast %cst_10 : f32 to vector<1x32xf32>
    %12 = arith.maximumf %10, %11 : vector<1x32xf32>
    %cst_11 = arith.constant 9.99999974E-6 : f32
    %13 = vector.broadcast %cst_11 : f32 to vector<1x32xf32>
    %14 = arith.addf %12, %13 : vector<1x32xf32>
    %15 = math.rsqrt %14 : vector<1x32xf32>
    %16 = vector.broadcast %6 : vector<1x32xf32> to vector<32x32xf32>
    %17 = arith.subf %0, %16 : vector<32x32xf32>
    %18 = arith.mulf %15, %3 : vector<1x32xf32>
    %19 = vector.broadcast %18 : vector<1x32xf32> to vector<32x32xf32>
    %20 = arith.mulf %17, %19 : vector<32x32xf32>
    %21 = vector.broadcast %4 : vector<1x32xf32> to vector<32x32xf32>
    %22 = arith.addf %20, %21 : vector<32x32xf32>
    %cst_12 = arith.constant 0.000000e+00 : f32
    %23 = vector.broadcast %cst_12 : f32 to vector<32x32xf32>
    %24 = arith.maximumf %22, %23 : vector<32x32xf32>
    %25 = arith.truncf %24 : vector<32x32xf32> to vector<32x32xbf16>
    %c0_13 = arith.constant 0 : index
    %c0_14 = arith.constant 0 : index
    %26 = vector.load %arg6[%c0_13, %c0_14] : memref<32x64xbf16, #tpu.memory_space<vmem>>, vector<32x64xbf16>
    %cst_15 = arith.constant dense<0.000000e+00> : vector<32x64xf32>
    %27 = tpu.matmul %25, %26, %cst_15 {dimension_numbers = #tpu.dot_dimension_numbers<[1], [0], [0], [1], [0, 0, 1, 1], [], []>} : vector<32x32xbf16>, vector<32x64xbf16>, vector<32x64xf32> -> vector<32x64xf32>
    %c0_16 = arith.constant 0 : index
    %c0_17 = arith.constant 0 : index
    %28 = vector.load %arg7[%c0_16, %c0_17] : memref<32x64xf32, #tpu.memory_space<vmem>>, vector<32x64xf32>
    tpu.vector_store %arg7[%c0_16, %c0_17], %27 {strides = array<i32>} : memref<32x64xf32, #tpu.memory_space<vmem>>, vector<32x64xf32>,
    %c0_i32 = arith.constant 0 : i32
    %29 = arith.cmpi eq, %arg0, %c0_i32 : i32
    %30 = arith.extui %29 : i1 to i32
    %c0_i32_18 = arith.constant 0 : i32
    %31 = arith.cmpi ne, %30, %c0_i32_18 : i32
    scf.if %31 {
      %cst_29 = arith.constant 0.000000e+00 : f32
      %43 = vector.broadcast %cst_29 : f32 to vector<1x64xf32>
      %c0_30 = arith.constant 0 : index
      %c0_31 = arith.constant 0 : index
      %44 = vector.load %arg8[%c0_30, %c0_31] : memref<1x64xf32, #tpu.memory_space<vmem>>, vector<1x64xf32>
      tpu.vector_store %arg8[%c0_30, %c0_31], %43 {strides = array<i32>} : memref<1x64xf32, #tpu.memory_space<vmem>>, vector<1x64xf32>,
      %cst_32 = arith.constant 0.000000e+00 : f32
      %45 = vector.broadcast %cst_32 : f32 to vector<1x64xf32>
      %c0_33 = arith.constant 0 : index
      %c0_34 = arith.constant 0 : index
      %46 = vector.load %arg9[%c0_33, %c0_34] : memref<1x64xf32, #tpu.memory_space<vmem>>, vector<1x64xf32>
      tpu.vector_store %arg9[%c0_33, %c0_34], %45 {strides = array<i32>} : memref<1x64xf32, #tpu.memory_space<vmem>>, vector<1x64xf32>,
    } else {
    }
    %c0_19 = arith.constant 0 : index
    %c0_20 = arith.constant 0 : index
    %32 = vector.load %arg8[%c0_19, %c0_20] : memref<1x64xf32, #tpu.memory_space<vmem>>, vector<1x64xf32>
    %cst_21 = arith.constant dense<0.000000e+00> : vector<64xf32>
    %33 = vector.multi_reduction <add>, %27, %cst_21 [0] : vector<32x64xf32> to vector<64xf32>
    %34 = vector.shape_cast %33 : vector<64xf32> to vector<1x64xf32>
    %35 = arith.addf %32, %34 : vector<1x64xf32>
    %c0_22 = arith.constant 0 : index
    %c0_23 = arith.constant 0 : index
    %36 = vector.load %arg8[%c0_22, %c0_23] : memref<1x64xf32, #tpu.memory_space<vmem>>, vector<1x64xf32>
    tpu.vector_store %arg8[%c0_22, %c0_23], %35 {strides = array<i32>} : memref<1x64xf32, #tpu.memory_space<vmem>>, vector<1x64xf32>,
    %c0_24 = arith.constant 0 : index
    %c0_25 = arith.constant 0 : index
    %37 = vector.load %arg9[%c0_24, %c0_25] : memref<1x64xf32, #tpu.memory_space<vmem>>, vector<1x64xf32>
    %38 = arith.mulf %27, %27 : vector<32x64xf32>
    %cst_26 = arith.constant dense<0.000000e+00> : vector<64xf32>
    %39 = vector.multi_reduction <add>, %38, %cst_26 [0] : vector<32x64xf32> to vector<64xf32>
    %40 = vector.shape_cast %39 : vector<64xf32> to vector<1x64xf32>
    %41 = arith.addf %37, %40 : vector<1x64xf32>
    %c0_27 = arith.constant 0 : index
    %c0_28 = arith.constant 0 : index
    %42 = vector.load %arg9[%c0_27, %c0_28] : memref<1x64xf32, #tpu.memory_space<vmem>>, vector<1x64xf32>
    tpu.vector_store %arg9[%c0_27, %c0_28], %41 {strides = array<i32>} : memref<1x64xf32, #tpu.memory_space<vmem>>, vector<1x64xf32>,
    return
  }
  func.func @transform_0(%arg0: i32) -> (i32, i32) {
    %c0_i32 = arith.constant 0 : i32
    %c0_i32_0 = arith.constant 0 : i32
    return %arg0, %c0_i32 : i32, i32
  }
  func.func @transform_1(%arg0: i32) -> (i32, i32) {
    %c0_i32 = arith.constant 0 : i32
    %c0_i32_0 = arith.constant 0 : i32
    %c0_i32_1 = arith.constant 0 : i32
    return %c0_i32, %c0_i32_0 : i32, i32
  }
  func.func @transform_2(%arg0: i32) -> (i32, i32) {
    %c0_i32 = arith.constant 0 : i32
    %c0_i32_0 = arith.constant 0 : i32
    %c0_i32_1 = arith.constant 0 : i32
    return %c0_i32, %c0_i32_0 : i32, i32
  }
  func.func @transform_3(%arg0: i32) -> (i32, i32) {
    %c0_i32 = arith.constant 0 : i32
    %c0_i32_0 = arith.constant 0 : i32
    %c0_i32_1 = arith.constant 0 : i32
    return %c0_i32, %c0_i32_0 : i32, i32
  }
  func.func @transform_4(%arg0: i32) -> (i32, i32) {
    %c0_i32 = arith.constant 0 : i32
    %c0_i32_0 = arith.constant 0 : i32
    %c0_i32_1 = arith.constant 0 : i32
    return %c0_i32, %c0_i32_0 : i32, i32
  }
  func.func @transform_5(%arg0: i32) -> (i32, i32) {
    %c0_i32 = arith.constant 0 : i32
    %c0_i32_0 = arith.constant 0 : i32
    %c0_i32_1 = arith.constant 0 : i32
    return %c0_i32, %c0_i32_0 : i32, i32
  }
  func.func @transform_6(%arg0: i32) -> (i32, i32) {
    %c0_i32 = arith.constant 0 : i32
    %c0_i32_0 = arith.constant 0 : i32
    return %arg0, %c0_i32 : i32, i32
  }
  func.func @transform_7(%arg0: i32) -> (i32, i32) {
    %c0_i32 = arith.constant 0 : i32
    %c0_i32_0 = arith.constant 0 : i32
    %c0_i32_1 = arith.constant 0 : i32
    return %c0_i32, %c0_i32_0 : i32, i32
  }
  func.func @transform_8(%arg0: i32) -> (i32, i32) {
    %c0_i32 = arith.constant 0 : i32
    %c0_i32_0 = arith.constant 0 : i32
    %c0_i32_1 = arith.constant 0 : i32
    return %c0_i32, %c0_i32_0 : i32, i32
  }
}

module attributes {stable_mosaic.version = 11 : i64} {
  func.func @_matmul_stats_kernel(%arg0: i32, %arg1: memref<32x3xf32, #tpu.memory_space<vmem>>, %arg2: memref<3x32xbf16, #tpu.memory_space<vmem>>, %arg3: memref<32x32xf32, #tpu.memory_space<vmem>>, %arg4: memref<1x32xf32, #tpu.memory_space<vmem>>, %arg5: memref<1x32xf32, #tpu.memory_space<vmem>>) attributes {dimension_semantics = [#tpu.dimension_semantics<arbitrary>], iteration_bounds = array<i64: 1>, scalar_prefetch = 0 : i64, scratch_operands = 0 : i64, tpu.core_type = #tpu.core_type<tc>, window_params = [{transform_indices = @transform_0, window_bounds = array<i64: 32, 3>}, {pipeline_mode = #tpu.pipeline_mode<synchronous>, transform_indices = @transform_1, window_bounds = array<i64: 3, 32>}, {transform_indices = @transform_2, window_bounds = array<i64: 32, 32>}, {pipeline_mode = #tpu.pipeline_mode<synchronous>, transform_indices = @transform_3, window_bounds = array<i64: 1, 32>}, {pipeline_mode = #tpu.pipeline_mode<synchronous>, transform_indices = @transform_4, window_bounds = array<i64: 1, 32>}]} {
    %c0 = arith.constant 0 : index
    %c0_0 = arith.constant 0 : index
    %0 = vector.load %arg1[%c0, %c0_0] : memref<32x3xf32, #tpu.memory_space<vmem>>, vector<32x3xf32>
    %1 = arith.truncf %0 : vector<32x3xf32> to vector<32x3xbf16>
    %c0_1 = arith.constant 0 : index
    %c0_2 = arith.constant 0 : index
    %2 = vector.load %arg2[%c0_1, %c0_2] : memref<3x32xbf16, #tpu.memory_space<vmem>>, vector<3x32xbf16>
    %cst = arith.constant dense<0.000000e+00> : vector<32x32xf32>
    %3 = tpu.matmul %1, %2, %cst {dimension_numbers = #tpu.dot_dimension_numbers<[1], [0], [0], [1], [0, 0, 1, 1], [], []>} : vector<32x3xbf16>, vector<3x32xbf16>, vector<32x32xf32> -> vector<32x32xf32>
    %c0_3 = arith.constant 0 : index
    %c0_4 = arith.constant 0 : index
    %4 = vector.load %arg3[%c0_3, %c0_4] : memref<32x32xf32, #tpu.memory_space<vmem>>, vector<32x32xf32>
    tpu.vector_store %arg3[%c0_3, %c0_4], %3 {strides = array<i32>} : memref<32x32xf32, #tpu.memory_space<vmem>>, vector<32x32xf32>,
    %c0_i32 = arith.constant 0 : i32
    %5 = arith.cmpi eq, %arg0, %c0_i32 : i32
    %6 = arith.extui %5 : i1 to i32
    %c0_i32_5 = arith.constant 0 : i32
    %7 = arith.cmpi ne, %6, %c0_i32_5 : i32
    scf.if %7 {
      %cst_16 = arith.constant 0.000000e+00 : f32
      %19 = vector.broadcast %cst_16 : f32 to vector<1x32xf32>
      %c0_17 = arith.constant 0 : index
      %c0_18 = arith.constant 0 : index
      %20 = vector.load %arg4[%c0_17, %c0_18] : memref<1x32xf32, #tpu.memory_space<vmem>>, vector<1x32xf32>
      tpu.vector_store %arg4[%c0_17, %c0_18], %19 {strides = array<i32>} : memref<1x32xf32, #tpu.memory_space<vmem>>, vector<1x32xf32>,
      %cst_19 = arith.constant 0.000000e+00 : f32
      %21 = vector.broadcast %cst_19 : f32 to vector<1x32xf32>
      %c0_20 = arith.constant 0 : index
      %c0_21 = arith.constant 0 : index
      %22 = vector.load %arg5[%c0_20, %c0_21] : memref<1x32xf32, #tpu.memory_space<vmem>>, vector<1x32xf32>
      tpu.vector_store %arg5[%c0_20, %c0_21], %21 {strides = array<i32>} : memref<1x32xf32, #tpu.memory_space<vmem>>, vector<1x32xf32>,
    } else {
    }
    %c0_6 = arith.constant 0 : index
    %c0_7 = arith.constant 0 : index
    %8 = vector.load %arg4[%c0_6, %c0_7] : memref<1x32xf32, #tpu.memory_space<vmem>>, vector<1x32xf32>
    %cst_8 = arith.constant dense<0.000000e+00> : vector<32xf32>
    %9 = vector.multi_reduction <add>, %3, %cst_8 [0] : vector<32x32xf32> to vector<32xf32>
    %10 = vector.shape_cast %9 : vector<32xf32> to vector<1x32xf32>
    %11 = arith.addf %8, %10 : vector<1x32xf32>
    %c0_9 = arith.constant 0 : index
    %c0_10 = arith.constant 0 : index
    %12 = vector.load %arg4[%c0_9, %c0_10] : memref<1x32xf32, #tpu.memory_space<vmem>>, vector<1x32xf32>
    tpu.vector_store %arg4[%c0_9, %c0_10], %11 {strides = array<i32>} : memref<1x32xf32, #tpu.memory_space<vmem>>, vector<1x32xf32>,
    %c0_11 = arith.constant 0 : index
    %c0_12 = arith.constant 0 : index
    %13 = vector.load %arg5[%c0_11, %c0_12] : memref<1x32xf32, #tpu.memory_space<vmem>>, vector<1x32xf32>
    %14 = arith.mulf %3, %3 : vector<32x32xf32>
    %cst_13 = arith.constant dense<0.000000e+00> : vector<32xf32>
    %15 = vector.multi_reduction <add>, %14, %cst_13 [0] : vector<32x32xf32> to vector<32xf32>
    %16 = vector.shape_cast %15 : vector<32xf32> to vector<1x32xf32>
    %17 = arith.addf %13, %16 : vector<1x32xf32>
    %c0_14 = arith.constant 0 : index
    %c0_15 = arith.constant 0 : index
    %18 = vector.load %arg5[%c0_14, %c0_15] : memref<1x32xf32, #tpu.memory_space<vmem>>, vector<1x32xf32>
    tpu.vector_store %arg5[%c0_14, %c0_15], %17 {strides = array<i32>} : memref<1x32xf32, #tpu.memory_space<vmem>>, vector<1x32xf32>,
    return
  }
  func.func @transform_0(%arg0: i32) -> (i32, i32) {
    %c0_i32 = arith.constant 0 : i32
    %c0_i32_0 = arith.constant 0 : i32
    return %arg0, %c0_i32 : i32, i32
  }
  func.func @transform_1(%arg0: i32) -> (i32, i32) {
    %c0_i32 = arith.constant 0 : i32
    %c0_i32_0 = arith.constant 0 : i32
    %c0_i32_1 = arith.constant 0 : i32
    return %c0_i32, %c0_i32_0 : i32, i32
  }
  func.func @transform_2(%arg0: i32) -> (i32, i32) {
    %c0_i32 = arith.constant 0 : i32
    %c0_i32_0 = arith.constant 0 : i32
    return %arg0, %c0_i32 : i32, i32
  }
  func.func @transform_3(%arg0: i32) -> (i32, i32) {
    %c0_i32 = arith.constant 0 : i32
    %c0_i32_0 = arith.constant 0 : i32
    %c0_i32_1 = arith.constant 0 : i32
    return %c0_i32, %c0_i32_0 : i32, i32
  }
  func.func @transform_4(%arg0: i32) -> (i32, i32) {
    %c0_i32 = arith.constant 0 : i32
    %c0_i32_0 = arith.constant 0 : i32
    %c0_i32_1 = arith.constant 0 : i32
    return %c0_i32, %c0_i32_0 : i32, i32
  }
}

module attributes {stable_mosaic.version = 11 : i64} {
  func.func @_bnrelu_kernel(%arg0: i32, %arg1: memref<32x64xf32, #tpu.memory_space<vmem>>, %arg2: memref<1x64xf32, #tpu.memory_space<vmem>>, %arg3: memref<1x64xf32, #tpu.memory_space<vmem>>, %arg4: memref<1x64xf32, #tpu.memory_space<vmem>>, %arg5: memref<1x64xf32, #tpu.memory_space<vmem>>, %arg6: memref<32x64xf32, #tpu.memory_space<vmem>>) attributes {dimension_semantics = [#tpu.dimension_semantics<parallel>], iteration_bounds = array<i64: 1>, scalar_prefetch = 0 : i64, scratch_operands = 0 : i64, tpu.core_type = #tpu.core_type<tc>, window_params = [{transform_indices = @transform_0, window_bounds = array<i64: 32, 64>}, {pipeline_mode = #tpu.pipeline_mode<synchronous>, transform_indices = @transform_1, window_bounds = array<i64: 1, 64>}, {pipeline_mode = #tpu.pipeline_mode<synchronous>, transform_indices = @transform_2, window_bounds = array<i64: 1, 64>}, {pipeline_mode = #tpu.pipeline_mode<synchronous>, transform_indices = @transform_3, window_bounds = array<i64: 1, 64>}, {pipeline_mode = #tpu.pipeline_mode<synchronous>, transform_indices = @transform_4, window_bounds = array<i64: 1, 64>}, {transform_indices = @transform_5, window_bounds = array<i64: 32, 64>}]} {
    %c0 = arith.constant 0 : index
    %c0_0 = arith.constant 0 : index
    %0 = vector.load %arg1[%c0, %c0_0] : memref<32x64xf32, #tpu.memory_space<vmem>>, vector<32x64xf32>
    %c0_1 = arith.constant 0 : index
    %c0_2 = arith.constant 0 : index
    %1 = vector.load %arg2[%c0_1, %c0_2] : memref<1x64xf32, #tpu.memory_space<vmem>>, vector<1x64xf32>
    %c0_3 = arith.constant 0 : index
    %c0_4 = arith.constant 0 : index
    %2 = vector.load %arg3[%c0_3, %c0_4] : memref<1x64xf32, #tpu.memory_space<vmem>>, vector<1x64xf32>
    %c0_5 = arith.constant 0 : index
    %c0_6 = arith.constant 0 : index
    %3 = vector.load %arg4[%c0_5, %c0_6] : memref<1x64xf32, #tpu.memory_space<vmem>>, vector<1x64xf32>
    %c0_7 = arith.constant 0 : index
    %c0_8 = arith.constant 0 : index
    %4 = vector.load %arg5[%c0_7, %c0_8] : memref<1x64xf32, #tpu.memory_space<vmem>>, vector<1x64xf32>
    %cst = arith.constant 3.125000e-02 : f32
    %5 = vector.broadcast %cst : f32 to vector<1x64xf32>
    %6 = arith.mulf %1, %5 : vector<1x64xf32>
    %cst_9 = arith.constant 3.125000e-02 : f32
    %7 = vector.broadcast %cst_9 : f32 to vector<1x64xf32>
    %8 = arith.mulf %2, %7 : vector<1x64xf32>
    %9 = arith.mulf %6, %6 : vector<1x64xf32>
    %10 = arith.subf %8, %9 : vector<1x64xf32>
    %cst_10 = arith.constant 0.000000e+00 : f32
    %11 = vector.broadcast %cst_10 : f32 to vector<1x64xf32>
    %12 = arith.maximumf %10, %11 : vector<1x64xf32>
    %cst_11 = arith.constant 9.99999974E-6 : f32
    %13 = vector.broadcast %cst_11 : f32 to vector<1x64xf32>
    %14 = arith.addf %12, %13 : vector<1x64xf32>
    %15 = math.rsqrt %14 : vector<1x64xf32>
    %16 = vector.broadcast %6 : vector<1x64xf32> to vector<32x64xf32>
    %17 = arith.subf %0, %16 : vector<32x64xf32>
    %18 = arith.mulf %15, %3 : vector<1x64xf32>
    %19 = vector.broadcast %18 : vector<1x64xf32> to vector<32x64xf32>
    %20 = arith.mulf %17, %19 : vector<32x64xf32>
    %21 = vector.broadcast %4 : vector<1x64xf32> to vector<32x64xf32>
    %22 = arith.addf %20, %21 : vector<32x64xf32>
    %cst_12 = arith.constant 0.000000e+00 : f32
    %23 = vector.broadcast %cst_12 : f32 to vector<32x64xf32>
    %24 = arith.maximumf %22, %23 : vector<32x64xf32>
    %c0_13 = arith.constant 0 : index
    %c0_14 = arith.constant 0 : index
    %25 = vector.load %arg6[%c0_13, %c0_14] : memref<32x64xf32, #tpu.memory_space<vmem>>, vector<32x64xf32>
    tpu.vector_store %arg6[%c0_13, %c0_14], %24 {strides = array<i32>} : memref<32x64xf32, #tpu.memory_space<vmem>>, vector<32x64xf32>,
    return
  }
  func.func @transform_0(%arg0: i32) -> (i32, i32) {
    %c0_i32 = arith.constant 0 : i32
    %c0_i32_0 = arith.constant 0 : i32
    return %arg0, %c0_i32 : i32, i32
  }
  func.func @transform_1(%arg0: i32) -> (i32, i32) {
    %c0_i32 = arith.constant 0 : i32
    %c0_i32_0 = arith.constant 0 : i32
    %c0_i32_1 = arith.constant 0 : i32
    return %c0_i32, %c0_i32_0 : i32, i32
  }
  func.func @transform_2(%arg0: i32) -> (i32, i32) {
    %c0_i32 = arith.constant 0 : i32
    %c0_i32_0 = arith.constant 0 : i32
    %c0_i32_1 = arith.constant 0 : i32
    return %c0_i32, %c0_i32_0 : i32, i32
  }
  func.func @transform_3(%arg0: i32) -> (i32, i32) {
    %c0_i32 = arith.constant 0 : i32
    %c0_i32_0 = arith.constant 0 : i32
    %c0_i32_1 = arith.constant 0 : i32
    return %c0_i32, %c0_i32_0 : i32, i32
  }
  func.func @transform_4(%arg0: i32) -> (i32, i32) {
    %c0_i32 = arith.constant 0 : i32
    %c0_i32_0 = arith.constant 0 : i32
    %c0_i32_1 = arith.constant 0 : i32
    return %c0_i32, %c0_i32_0 : i32, i32
  }
  func.func @transform_5(%arg0: i32) -> (i32, i32) {
    %c0_i32 = arith.constant 0 : i32
    %c0_i32_0 = arith.constant 0 : i32
    return %arg0, %c0_i32 : i32, i32
  }
}

module attributes {stable_mosaic.version = 11 : i64} {
  func.func @_matmul_stats_kernel(%arg0: i32, %arg1: memref<8x64xf32, #tpu.memory_space<vmem>>, %arg2: memref<64x32xbf16, #tpu.memory_space<vmem>>, %arg3: memref<8x32xf32, #tpu.memory_space<vmem>>, %arg4: memref<1x32xf32, #tpu.memory_space<vmem>>, %arg5: memref<1x32xf32, #tpu.memory_space<vmem>>) attributes {dimension_semantics = [#tpu.dimension_semantics<arbitrary>], iteration_bounds = array<i64: 1>, scalar_prefetch = 0 : i64, scratch_operands = 0 : i64, tpu.core_type = #tpu.core_type<tc>, window_params = [{transform_indices = @transform_0, window_bounds = array<i64: 8, 64>}, {pipeline_mode = #tpu.pipeline_mode<synchronous>, transform_indices = @transform_1, window_bounds = array<i64: 64, 32>}, {transform_indices = @transform_2, window_bounds = array<i64: 8, 32>}, {pipeline_mode = #tpu.pipeline_mode<synchronous>, transform_indices = @transform_3, window_bounds = array<i64: 1, 32>}, {pipeline_mode = #tpu.pipeline_mode<synchronous>, transform_indices = @transform_4, window_bounds = array<i64: 1, 32>}]} {
    %c0 = arith.constant 0 : index
    %c0_0 = arith.constant 0 : index
    %0 = vector.load %arg1[%c0, %c0_0] : memref<8x64xf32, #tpu.memory_space<vmem>>, vector<8x64xf32>
    %1 = arith.truncf %0 : vector<8x64xf32> to vector<8x64xbf16>
    %c0_1 = arith.constant 0 : index
    %c0_2 = arith.constant 0 : index
    %2 = vector.load %arg2[%c0_1, %c0_2] : memref<64x32xbf16, #tpu.memory_space<vmem>>, vector<64x32xbf16>
    %cst = arith.constant dense<0.000000e+00> : vector<8x32xf32>
    %3 = tpu.matmul %1, %2, %cst {dimension_numbers = #tpu.dot_dimension_numbers<[1], [0], [0], [1], [0, 0, 1, 1], [], []>} : vector<8x64xbf16>, vector<64x32xbf16>, vector<8x32xf32> -> vector<8x32xf32>
    %c0_3 = arith.constant 0 : index
    %c0_4 = arith.constant 0 : index
    %4 = vector.load %arg3[%c0_3, %c0_4] : memref<8x32xf32, #tpu.memory_space<vmem>>, vector<8x32xf32>
    tpu.vector_store %arg3[%c0_3, %c0_4], %3 {strides = array<i32>} : memref<8x32xf32, #tpu.memory_space<vmem>>, vector<8x32xf32>,
    %c0_i32 = arith.constant 0 : i32
    %5 = arith.cmpi eq, %arg0, %c0_i32 : i32
    %6 = arith.extui %5 : i1 to i32
    %c0_i32_5 = arith.constant 0 : i32
    %7 = arith.cmpi ne, %6, %c0_i32_5 : i32
    scf.if %7 {
      %cst_16 = arith.constant 0.000000e+00 : f32
      %29 = vector.broadcast %cst_16 : f32 to vector<1x32xf32>
      %c0_17 = arith.constant 0 : index
      %c0_18 = arith.constant 0 : index
      %30 = vector.load %arg4[%c0_17, %c0_18] : memref<1x32xf32, #tpu.memory_space<vmem>>, vector<1x32xf32>
      tpu.vector_store %arg4[%c0_17, %c0_18], %29 {strides = array<i32>} : memref<1x32xf32, #tpu.memory_space<vmem>>, vector<1x32xf32>,
      %cst_19 = arith.constant 0.000000e+00 : f32
      %31 = vector.broadcast %cst_19 : f32 to vector<1x32xf32>
      %c0_20 = arith.constant 0 : index
      %c0_21 = arith.constant 0 : index
      %32 = vector.load %arg5[%c0_20, %c0_21] : memref<1x32xf32, #tpu.memory_space<vmem>>, vector<1x32xf32>
      tpu.vector_store %arg5[%c0_20, %c0_21], %31 {strides = array<i32>} : memref<1x32xf32, #tpu.memory_space<vmem>>, vector<1x32xf32>,
    } else {
    }
    %c8_i32 = arith.constant 8 : i32
    %8 = arith.muli %arg0, %c8_i32 : i32
    %9 = tpu.iota {dimensions = array<i32: 0>} : vector<8x1xi32>
    %10 = vector.broadcast %8 : i32 to vector<8x1xi32>
    %11 = arith.addi %10, %9 : vector<8x1xi32>
    %c2_i32 = arith.constant 2 : i32
    %12 = vector.broadcast %c2_i32 : i32 to vector<8x1xi32>
    %13 = arith.cmpi slt, %11, %12 : vector<8x1xi32>
    %14 = arith.extui %13 : vector<8x1xi1> to vector<8x1xi32>
    %15 = arith.sitofp %14 : vector<8x1xi32> to vector<8x1xf32>
    %16 = vector.broadcast %15 : vector<8x1xf32> to vector<8x32xf32>
    %17 = arith.mulf %3, %16 : vector<8x32xf32>
    %c0_6 = arith.constant 0 : index
    %c0_7 = arith.constant 0 : index
    %18 = vector.load %arg4[%c0_6, %c0_7] : memref<1x32xf32, #tpu.memory_space<vmem>>, vector<1x32xf32>
    %cst_8 = arith.constant dense<0.000000e+00> : vector<32xf32>
    %19 = vector.multi_reduction <add>, %17, %cst_8 [0] : vector<8x32xf32> to vector<32xf32>
    %20 = vector.shape_cast %19 : vector<32xf32> to vector<1x32xf32>
    %21 = arith.addf %18, %20 : vector<1x32xf32>
    %c0_9 = arith.constant 0 : index
    %c0_10 = arith.constant 0 : index
    %22 = vector.load %arg4[%c0_9, %c0_10] : memref<1x32xf32, #tpu.memory_space<vmem>>, vector<1x32xf32>
    tpu.vector_store %arg4[%c0_9, %c0_10], %21 {strides = array<i32>} : memref<1x32xf32, #tpu.memory_space<vmem>>, vector<1x32xf32>,
    %c0_11 = arith.constant 0 : index
    %c0_12 = arith.constant 0 : index
    %23 = vector.load %arg5[%c0_11, %c0_12] : memref<1x32xf32, #tpu.memory_space<vmem>>, vector<1x32xf32>
    %24 = arith.mulf %17, %17 : vector<8x32xf32>
    %cst_13 = arith.constant dense<0.000000e+00> : vector<32xf32>
    %25 = vector.multi_reduction <add>, %24, %cst_13 [0] : vector<8x32xf32> to vector<32xf32>
    %26 = vector.shape_cast %25 : vector<32xf32> to vector<1x32xf32>
    %27 = arith.addf %23, %26 : vector<1x32xf32>
    %c0_14 = arith.constant 0 : index
    %c0_15 = arith.constant 0 : index
    %28 = vector.load %arg5[%c0_14, %c0_15] : memref<1x32xf32, #tpu.memory_space<vmem>>, vector<1x32xf32>
    tpu.vector_store %arg5[%c0_14, %c0_15], %27 {strides = array<i32>} : memref<1x32xf32, #tpu.memory_space<vmem>>, vector<1x32xf32>,
    return
  }
  func.func @transform_0(%arg0: i32) -> (i32, i32) {
    %c0_i32 = arith.constant 0 : i32
    %c0_i32_0 = arith.constant 0 : i32
    return %arg0, %c0_i32 : i32, i32
  }
  func.func @transform_1(%arg0: i32) -> (i32, i32) {
    %c0_i32 = arith.constant 0 : i32
    %c0_i32_0 = arith.constant 0 : i32
    %c0_i32_1 = arith.constant 0 : i32
    return %c0_i32, %c0_i32_0 : i32, i32
  }
  func.func @transform_2(%arg0: i32) -> (i32, i32) {
    %c0_i32 = arith.constant 0 : i32
    %c0_i32_0 = arith.constant 0 : i32
    return %arg0, %c0_i32 : i32, i32
  }
  func.func @transform_3(%arg0: i32) -> (i32, i32) {
    %c0_i32 = arith.constant 0 : i32
    %c0_i32_0 = arith.constant 0 : i32
    %c0_i32_1 = arith.constant 0 : i32
    return %c0_i32, %c0_i32_0 : i32, i32
  }
  func.func @transform_4(%arg0: i32) -> (i32, i32) {
    %c0_i32 = arith.constant 0 : i32
    %c0_i32_0 = arith.constant 0 : i32
    %c0_i32_1 = arith.constant 0 : i32
    return %c0_i32, %c0_i32_0 : i32, i32
  }
}

module attributes {stable_mosaic.version = 11 : i64} {
  func.func @_bnrelu_linear_kernel(%arg0: i32, %arg1: memref<8x32xf32, #tpu.memory_space<vmem>>, %arg2: memref<1x32xf32, #tpu.memory_space<vmem>>, %arg3: memref<1x32xf32, #tpu.memory_space<vmem>>, %arg4: memref<1x32xf32, #tpu.memory_space<vmem>>, %arg5: memref<1x32xf32, #tpu.memory_space<vmem>>, %arg6: memref<32x9xbf16, #tpu.memory_space<vmem>>, %arg7: memref<1x9xf32, #tpu.memory_space<vmem>>, %arg8: memref<8x9xf32, #tpu.memory_space<vmem>>) attributes {dimension_semantics = [#tpu.dimension_semantics<parallel>], iteration_bounds = array<i64: 1>, scalar_prefetch = 0 : i64, scratch_operands = 0 : i64, tpu.core_type = #tpu.core_type<tc>, window_params = [{transform_indices = @transform_0, window_bounds = array<i64: 8, 32>}, {pipeline_mode = #tpu.pipeline_mode<synchronous>, transform_indices = @transform_1, window_bounds = array<i64: 1, 32>}, {pipeline_mode = #tpu.pipeline_mode<synchronous>, transform_indices = @transform_2, window_bounds = array<i64: 1, 32>}, {pipeline_mode = #tpu.pipeline_mode<synchronous>, transform_indices = @transform_3, window_bounds = array<i64: 1, 32>}, {pipeline_mode = #tpu.pipeline_mode<synchronous>, transform_indices = @transform_4, window_bounds = array<i64: 1, 32>}, {pipeline_mode = #tpu.pipeline_mode<synchronous>, transform_indices = @transform_5, window_bounds = array<i64: 32, 9>}, {pipeline_mode = #tpu.pipeline_mode<synchronous>, transform_indices = @transform_6, window_bounds = array<i64: 1, 9>}, {transform_indices = @transform_7, window_bounds = array<i64: 8, 9>}]} {
    %c0 = arith.constant 0 : index
    %c0_0 = arith.constant 0 : index
    %0 = vector.load %arg1[%c0, %c0_0] : memref<8x32xf32, #tpu.memory_space<vmem>>, vector<8x32xf32>
    %c0_1 = arith.constant 0 : index
    %c0_2 = arith.constant 0 : index
    %1 = vector.load %arg2[%c0_1, %c0_2] : memref<1x32xf32, #tpu.memory_space<vmem>>, vector<1x32xf32>
    %c0_3 = arith.constant 0 : index
    %c0_4 = arith.constant 0 : index
    %2 = vector.load %arg3[%c0_3, %c0_4] : memref<1x32xf32, #tpu.memory_space<vmem>>, vector<1x32xf32>
    %c0_5 = arith.constant 0 : index
    %c0_6 = arith.constant 0 : index
    %3 = vector.load %arg4[%c0_5, %c0_6] : memref<1x32xf32, #tpu.memory_space<vmem>>, vector<1x32xf32>
    %c0_7 = arith.constant 0 : index
    %c0_8 = arith.constant 0 : index
    %4 = vector.load %arg5[%c0_7, %c0_8] : memref<1x32xf32, #tpu.memory_space<vmem>>, vector<1x32xf32>
    %cst = arith.constant 5.000000e-01 : f32
    %5 = vector.broadcast %cst : f32 to vector<1x32xf32>
    %6 = arith.mulf %1, %5 : vector<1x32xf32>
    %cst_9 = arith.constant 5.000000e-01 : f32
    %7 = vector.broadcast %cst_9 : f32 to vector<1x32xf32>
    %8 = arith.mulf %2, %7 : vector<1x32xf32>
    %9 = arith.mulf %6, %6 : vector<1x32xf32>
    %10 = arith.subf %8, %9 : vector<1x32xf32>
    %cst_10 = arith.constant 0.000000e+00 : f32
    %11 = vector.broadcast %cst_10 : f32 to vector<1x32xf32>
    %12 = arith.maximumf %10, %11 : vector<1x32xf32>
    %cst_11 = arith.constant 9.99999974E-6 : f32
    %13 = vector.broadcast %cst_11 : f32 to vector<1x32xf32>
    %14 = arith.addf %12, %13 : vector<1x32xf32>
    %15 = math.rsqrt %14 : vector<1x32xf32>
    %16 = vector.broadcast %6 : vector<1x32xf32> to vector<8x32xf32>
    %17 = arith.subf %0, %16 : vector<8x32xf32>
    %18 = arith.mulf %15, %3 : vector<1x32xf32>
    %19 = vector.broadcast %18 : vector<1x32xf32> to vector<8x32xf32>
    %20 = arith.mulf %17, %19 : vector<8x32xf32>
    %21 = vector.broadcast %4 : vector<1x32xf32> to vector<8x32xf32>
    %22 = arith.addf %20, %21 : vector<8x32xf32>
    %cst_12 = arith.constant 0.000000e+00 : f32
    %23 = vector.broadcast %cst_12 : f32 to vector<8x32xf32>
    %24 = arith.maximumf %22, %23 : vector<8x32xf32>
    %25 = arith.truncf %24 : vector<8x32xf32> to vector<8x32xbf16>
    %c0_13 = arith.constant 0 : index
    %c0_14 = arith.constant 0 : index
    %26 = vector.load %arg6[%c0_13, %c0_14] : memref<32x9xbf16, #tpu.memory_space<vmem>>, vector<32x9xbf16>
    %cst_15 = arith.constant dense<0.000000e+00> : vector<8x9xf32>
    %27 = tpu.matmul %25, %26, %cst_15 {dimension_numbers = #tpu.dot_dimension_numbers<[1], [0], [0], [1], [0, 0, 1, 1], [], []>} : vector<8x32xbf16>, vector<32x9xbf16>, vector<8x9xf32> -> vector<8x9xf32>
    %c0_16 = arith.constant 0 : index
    %c0_17 = arith.constant 0 : index
    %28 = vector.load %arg7[%c0_16, %c0_17] : memref<1x9xf32, #tpu.memory_space<vmem>>, vector<1x9xf32>
    %29 = vector.broadcast %28 : vector<1x9xf32> to vector<8x9xf32>
    %30 = arith.addf %27, %29 : vector<8x9xf32>
    %c0_18 = arith.constant 0 : index
    %c0_19 = arith.constant 0 : index
    %31 = vector.load %arg8[%c0_18, %c0_19] : memref<8x9xf32, #tpu.memory_space<vmem>>, vector<8x9xf32>
    tpu.vector_store %arg8[%c0_18, %c0_19], %30 {strides = array<i32>} : memref<8x9xf32, #tpu.memory_space<vmem>>, vector<8x9xf32>,
    return
  }
  func.func @transform_0(%arg0: i32) -> (i32, i32) {
    %c0_i32 = arith.constant 0 : i32
    %c0_i32_0 = arith.constant 0 : i32
    return %arg0, %c0_i32 : i32, i32
  }
  func.func @transform_1(%arg0: i32) -> (i32, i32) {
    %c0_i32 = arith.constant 0 : i32
    %c0_i32_0 = arith.constant 0 : i32
    %c0_i32_1 = arith.constant 0 : i32
    return %c0_i32, %c0_i32_0 : i32, i32
  }
  func.func @transform_2(%arg0: i32) -> (i32, i32) {
    %c0_i32 = arith.constant 0 : i32
    %c0_i32_0 = arith.constant 0 : i32
    %c0_i32_1 = arith.constant 0 : i32
    return %c0_i32, %c0_i32_0 : i32, i32
  }
  func.func @transform_3(%arg0: i32) -> (i32, i32) {
    %c0_i32 = arith.constant 0 : i32
    %c0_i32_0 = arith.constant 0 : i32
    %c0_i32_1 = arith.constant 0 : i32
    return %c0_i32, %c0_i32_0 : i32, i32
  }
  func.func @transform_4(%arg0: i32) -> (i32, i32) {
    %c0_i32 = arith.constant 0 : i32
    %c0_i32_0 = arith.constant 0 : i32
    %c0_i32_1 = arith.constant 0 : i32
    return %c0_i32, %c0_i32_0 : i32, i32
  }
  func.func @transform_5(%arg0: i32) -> (i32, i32) {
    %c0_i32 = arith.constant 0 : i32
    %c0_i32_0 = arith.constant 0 : i32
    %c0_i32_1 = arith.constant 0 : i32
    return %c0_i32, %c0_i32_0 : i32, i32
  }
  func.func @transform_6(%arg0: i32) -> (i32, i32) {
    %c0_i32 = arith.constant 0 : i32
    %c0_i32_0 = arith.constant 0 : i32
    %c0_i32_1 = arith.constant 0 : i32
    return %c0_i32, %c0_i32_0 : i32, i32
  }
  func.func @transform_7(%arg0: i32) -> (i32, i32) {
    %c0_i32 = arith.constant 0 : i32
    %c0_i32_0 = arith.constant 0 : i32
    return %arg0, %c0_i32 : i32, i32
  }
}

module attributes {stable_mosaic.version = 11 : i64} {
  func.func @_matmul_stats_kernel(%arg0: i32, %arg1: memref<32x128xf32, #tpu.memory_space<vmem>>, %arg2: memref<128x64xbf16, #tpu.memory_space<vmem>>, %arg3: memref<32x64xf32, #tpu.memory_space<vmem>>, %arg4: memref<1x64xf32, #tpu.memory_space<vmem>>, %arg5: memref<1x64xf32, #tpu.memory_space<vmem>>) attributes {dimension_semantics = [#tpu.dimension_semantics<arbitrary>], iteration_bounds = array<i64: 1>, scalar_prefetch = 0 : i64, scratch_operands = 0 : i64, tpu.core_type = #tpu.core_type<tc>, window_params = [{transform_indices = @transform_0, window_bounds = array<i64: 32, 128>}, {pipeline_mode = #tpu.pipeline_mode<synchronous>, transform_indices = @transform_1, window_bounds = array<i64: 128, 64>}, {transform_indices = @transform_2, window_bounds = array<i64: 32, 64>}, {pipeline_mode = #tpu.pipeline_mode<synchronous>, transform_indices = @transform_3, window_bounds = array<i64: 1, 64>}, {pipeline_mode = #tpu.pipeline_mode<synchronous>, transform_indices = @transform_4, window_bounds = array<i64: 1, 64>}]} {
    %c0 = arith.constant 0 : index
    %c0_0 = arith.constant 0 : index
    %0 = vector.load %arg1[%c0, %c0_0] : memref<32x128xf32, #tpu.memory_space<vmem>>, vector<32x128xf32>
    %1 = arith.truncf %0 : vector<32x128xf32> to vector<32x128xbf16>
    %c0_1 = arith.constant 0 : index
    %c0_2 = arith.constant 0 : index
    %2 = vector.load %arg2[%c0_1, %c0_2] : memref<128x64xbf16, #tpu.memory_space<vmem>>, vector<128x64xbf16>
    %cst = arith.constant dense<0.000000e+00> : vector<32x64xf32>
    %3 = tpu.matmul %1, %2, %cst {dimension_numbers = #tpu.dot_dimension_numbers<[1], [0], [0], [1], [0, 0, 1, 1], [], []>} : vector<32x128xbf16>, vector<128x64xbf16>, vector<32x64xf32> -> vector<32x64xf32>
    %c0_3 = arith.constant 0 : index
    %c0_4 = arith.constant 0 : index
    %4 = vector.load %arg3[%c0_3, %c0_4] : memref<32x64xf32, #tpu.memory_space<vmem>>, vector<32x64xf32>
    tpu.vector_store %arg3[%c0_3, %c0_4], %3 {strides = array<i32>} : memref<32x64xf32, #tpu.memory_space<vmem>>, vector<32x64xf32>,
    %c0_i32 = arith.constant 0 : i32
    %5 = arith.cmpi eq, %arg0, %c0_i32 : i32
    %6 = arith.extui %5 : i1 to i32
    %c0_i32_5 = arith.constant 0 : i32
    %7 = arith.cmpi ne, %6, %c0_i32_5 : i32
    scf.if %7 {
      %cst_16 = arith.constant 0.000000e+00 : f32
      %19 = vector.broadcast %cst_16 : f32 to vector<1x64xf32>
      %c0_17 = arith.constant 0 : index
      %c0_18 = arith.constant 0 : index
      %20 = vector.load %arg4[%c0_17, %c0_18] : memref<1x64xf32, #tpu.memory_space<vmem>>, vector<1x64xf32>
      tpu.vector_store %arg4[%c0_17, %c0_18], %19 {strides = array<i32>} : memref<1x64xf32, #tpu.memory_space<vmem>>, vector<1x64xf32>,
      %cst_19 = arith.constant 0.000000e+00 : f32
      %21 = vector.broadcast %cst_19 : f32 to vector<1x64xf32>
      %c0_20 = arith.constant 0 : index
      %c0_21 = arith.constant 0 : index
      %22 = vector.load %arg5[%c0_20, %c0_21] : memref<1x64xf32, #tpu.memory_space<vmem>>, vector<1x64xf32>
      tpu.vector_store %arg5[%c0_20, %c0_21], %21 {strides = array<i32>} : memref<1x64xf32, #tpu.memory_space<vmem>>, vector<1x64xf32>,
    } else {
    }
    %c0_6 = arith.constant 0 : index
    %c0_7 = arith.constant 0 : index
    %8 = vector.load %arg4[%c0_6, %c0_7] : memref<1x64xf32, #tpu.memory_space<vmem>>, vector<1x64xf32>
    %cst_8 = arith.constant dense<0.000000e+00> : vector<64xf32>
    %9 = vector.multi_reduction <add>, %3, %cst_8 [0] : vector<32x64xf32> to vector<64xf32>
    %10 = vector.shape_cast %9 : vector<64xf32> to vector<1x64xf32>
    %11 = arith.addf %8, %10 : vector<1x64xf32>
    %c0_9 = arith.constant 0 : index
    %c0_10 = arith.constant 0 : index
    %12 = vector.load %arg4[%c0_9, %c0_10] : memref<1x64xf32, #tpu.memory_space<vmem>>, vector<1x64xf32>
    tpu.vector_store %arg4[%c0_9, %c0_10], %11 {strides = array<i32>} : memref<1x64xf32, #tpu.memory_space<vmem>>, vector<1x64xf32>,
    %c0_11 = arith.constant 0 : index
    %c0_12 = arith.constant 0 : index
    %13 = vector.load %arg5[%c0_11, %c0_12] : memref<1x64xf32, #tpu.memory_space<vmem>>, vector<1x64xf32>
    %14 = arith.mulf %3, %3 : vector<32x64xf32>
    %cst_13 = arith.constant dense<0.000000e+00> : vector<64xf32>
    %15 = vector.multi_reduction <add>, %14, %cst_13 [0] : vector<32x64xf32> to vector<64xf32>
    %16 = vector.shape_cast %15 : vector<64xf32> to vector<1x64xf32>
    %17 = arith.addf %13, %16 : vector<1x64xf32>
    %c0_14 = arith.constant 0 : index
    %c0_15 = arith.constant 0 : index
    %18 = vector.load %arg5[%c0_14, %c0_15] : memref<1x64xf32, #tpu.memory_space<vmem>>, vector<1x64xf32>
    tpu.vector_store %arg5[%c0_14, %c0_15], %17 {strides = array<i32>} : memref<1x64xf32, #tpu.memory_space<vmem>>, vector<1x64xf32>,
    return
  }
  func.func @transform_0(%arg0: i32) -> (i32, i32) {
    %c0_i32 = arith.constant 0 : i32
    %c0_i32_0 = arith.constant 0 : i32
    return %arg0, %c0_i32 : i32, i32
  }
  func.func @transform_1(%arg0: i32) -> (i32, i32) {
    %c0_i32 = arith.constant 0 : i32
    %c0_i32_0 = arith.constant 0 : i32
    %c0_i32_1 = arith.constant 0 : i32
    return %c0_i32, %c0_i32_0 : i32, i32
  }
  func.func @transform_2(%arg0: i32) -> (i32, i32) {
    %c0_i32 = arith.constant 0 : i32
    %c0_i32_0 = arith.constant 0 : i32
    return %arg0, %c0_i32 : i32, i32
  }
  func.func @transform_3(%arg0: i32) -> (i32, i32) {
    %c0_i32 = arith.constant 0 : i32
    %c0_i32_0 = arith.constant 0 : i32
    %c0_i32_1 = arith.constant 0 : i32
    return %c0_i32, %c0_i32_0 : i32, i32
  }
  func.func @transform_4(%arg0: i32) -> (i32, i32) {
    %c0_i32 = arith.constant 0 : i32
    %c0_i32_0 = arith.constant 0 : i32
    %c0_i32_1 = arith.constant 0 : i32
    return %c0_i32, %c0_i32_0 : i32, i32
  }
}

module attributes {stable_mosaic.version = 11 : i64} {
  func.func @_bnrelu_linear_kernel(%arg0: i32, %arg1: memref<32x64xf32, #tpu.memory_space<vmem>>, %arg2: memref<1x64xf32, #tpu.memory_space<vmem>>, %arg3: memref<1x64xf32, #tpu.memory_space<vmem>>, %arg4: memref<1x64xf32, #tpu.memory_space<vmem>>, %arg5: memref<1x64xf32, #tpu.memory_space<vmem>>, %arg6: memref<64x20xbf16, #tpu.memory_space<vmem>>, %arg7: memref<1x20xf32, #tpu.memory_space<vmem>>, %arg8: memref<32x20xf32, #tpu.memory_space<vmem>>) attributes {dimension_semantics = [#tpu.dimension_semantics<parallel>], iteration_bounds = array<i64: 1>, scalar_prefetch = 0 : i64, scratch_operands = 0 : i64, tpu.core_type = #tpu.core_type<tc>, window_params = [{transform_indices = @transform_0, window_bounds = array<i64: 32, 64>}, {pipeline_mode = #tpu.pipeline_mode<synchronous>, transform_indices = @transform_1, window_bounds = array<i64: 1, 64>}, {pipeline_mode = #tpu.pipeline_mode<synchronous>, transform_indices = @transform_2, window_bounds = array<i64: 1, 64>}, {pipeline_mode = #tpu.pipeline_mode<synchronous>, transform_indices = @transform_3, window_bounds = array<i64: 1, 64>}, {pipeline_mode = #tpu.pipeline_mode<synchronous>, transform_indices = @transform_4, window_bounds = array<i64: 1, 64>}, {pipeline_mode = #tpu.pipeline_mode<synchronous>, transform_indices = @transform_5, window_bounds = array<i64: 64, 20>}, {pipeline_mode = #tpu.pipeline_mode<synchronous>, transform_indices = @transform_6, window_bounds = array<i64: 1, 20>}, {transform_indices = @transform_7, window_bounds = array<i64: 32, 20>}]} {
    %c0 = arith.constant 0 : index
    %c0_0 = arith.constant 0 : index
    %0 = vector.load %arg1[%c0, %c0_0] : memref<32x64xf32, #tpu.memory_space<vmem>>, vector<32x64xf32>
    %c0_1 = arith.constant 0 : index
    %c0_2 = arith.constant 0 : index
    %1 = vector.load %arg2[%c0_1, %c0_2] : memref<1x64xf32, #tpu.memory_space<vmem>>, vector<1x64xf32>
    %c0_3 = arith.constant 0 : index
    %c0_4 = arith.constant 0 : index
    %2 = vector.load %arg3[%c0_3, %c0_4] : memref<1x64xf32, #tpu.memory_space<vmem>>, vector<1x64xf32>
    %c0_5 = arith.constant 0 : index
    %c0_6 = arith.constant 0 : index
    %3 = vector.load %arg4[%c0_5, %c0_6] : memref<1x64xf32, #tpu.memory_space<vmem>>, vector<1x64xf32>
    %c0_7 = arith.constant 0 : index
    %c0_8 = arith.constant 0 : index
    %4 = vector.load %arg5[%c0_7, %c0_8] : memref<1x64xf32, #tpu.memory_space<vmem>>, vector<1x64xf32>
    %cst = arith.constant 3.125000e-02 : f32
    %5 = vector.broadcast %cst : f32 to vector<1x64xf32>
    %6 = arith.mulf %1, %5 : vector<1x64xf32>
    %cst_9 = arith.constant 3.125000e-02 : f32
    %7 = vector.broadcast %cst_9 : f32 to vector<1x64xf32>
    %8 = arith.mulf %2, %7 : vector<1x64xf32>
    %9 = arith.mulf %6, %6 : vector<1x64xf32>
    %10 = arith.subf %8, %9 : vector<1x64xf32>
    %cst_10 = arith.constant 0.000000e+00 : f32
    %11 = vector.broadcast %cst_10 : f32 to vector<1x64xf32>
    %12 = arith.maximumf %10, %11 : vector<1x64xf32>
    %cst_11 = arith.constant 9.99999974E-6 : f32
    %13 = vector.broadcast %cst_11 : f32 to vector<1x64xf32>
    %14 = arith.addf %12, %13 : vector<1x64xf32>
    %15 = math.rsqrt %14 : vector<1x64xf32>
    %16 = vector.broadcast %6 : vector<1x64xf32> to vector<32x64xf32>
    %17 = arith.subf %0, %16 : vector<32x64xf32>
    %18 = arith.mulf %15, %3 : vector<1x64xf32>
    %19 = vector.broadcast %18 : vector<1x64xf32> to vector<32x64xf32>
    %20 = arith.mulf %17, %19 : vector<32x64xf32>
    %21 = vector.broadcast %4 : vector<1x64xf32> to vector<32x64xf32>
    %22 = arith.addf %20, %21 : vector<32x64xf32>
    %cst_12 = arith.constant 0.000000e+00 : f32
    %23 = vector.broadcast %cst_12 : f32 to vector<32x64xf32>
    %24 = arith.maximumf %22, %23 : vector<32x64xf32>
    %25 = arith.truncf %24 : vector<32x64xf32> to vector<32x64xbf16>
    %c0_13 = arith.constant 0 : index
    %c0_14 = arith.constant 0 : index
    %26 = vector.load %arg6[%c0_13, %c0_14] : memref<64x20xbf16, #tpu.memory_space<vmem>>, vector<64x20xbf16>
    %cst_15 = arith.constant dense<0.000000e+00> : vector<32x20xf32>
    %27 = tpu.matmul %25, %26, %cst_15 {dimension_numbers = #tpu.dot_dimension_numbers<[1], [0], [0], [1], [0, 0, 1, 1], [], []>} : vector<32x64xbf16>, vector<64x20xbf16>, vector<32x20xf32> -> vector<32x20xf32>
    %c0_16 = arith.constant 0 : index
    %c0_17 = arith.constant 0 : index
    %28 = vector.load %arg7[%c0_16, %c0_17] : memref<1x20xf32, #tpu.memory_space<vmem>>, vector<1x20xf32>
    %29 = vector.broadcast %28 : vector<1x20xf32> to vector<32x20xf32>
    %30 = arith.addf %27, %29 : vector<32x20xf32>
    %c0_18 = arith.constant 0 : index
    %c0_19 = arith.constant 0 : index
    %31 = vector.load %arg8[%c0_18, %c0_19] : memref<32x20xf32, #tpu.memory_space<vmem>>, vector<32x20xf32>
    tpu.vector_store %arg8[%c0_18, %c0_19], %30 {strides = array<i32>} : memref<32x20xf32, #tpu.memory_space<vmem>>, vector<32x20xf32>,
    return
  }
  func.func @transform_0(%arg0: i32) -> (i32, i32) {
    %c0_i32 = arith.constant 0 : i32
    %c0_i32_0 = arith.constant 0 : i32
    return %arg0, %c0_i32 : i32, i32
  }
  func.func @transform_1(%arg0: i32) -> (i32, i32) {
    %c0_i32 = arith.constant 0 : i32
    %c0_i32_0 = arith.constant 0 : i32
    %c0_i32_1 = arith.constant 0 : i32
    return %c0_i32, %c0_i32_0 : i32, i32
  }
  func.func @transform_2(%arg0: i32) -> (i32, i32) {
    %c0_i32 = arith.constant 0 : i32
    %c0_i32_0 = arith.constant 0 : i32
    %c0_i32_1 = arith.constant 0 : i32
    return %c0_i32, %c0_i32_0 : i32, i32
  }
  func.func @transform_3(%arg0: i32) -> (i32, i32) {
    %c0_i32 = arith.constant 0 : i32
    %c0_i32_0 = arith.constant 0 : i32
    %c0_i32_1 = arith.constant 0 : i32
    return %c0_i32, %c0_i32_0 : i32, i32
  }
  func.func @transform_4(%arg0: i32) -> (i32, i32) {
    %c0_i32 = arith.constant 0 : i32
    %c0_i32_0 = arith.constant 0 : i32
    %c0_i32_1 = arith.constant 0 : i32
    return %c0_i32, %c0_i32_0 : i32, i32
  }
  func.func @transform_5(%arg0: i32) -> (i32, i32) {
    %c0_i32 = arith.constant 0 : i32
    %c0_i32_0 = arith.constant 0 : i32
    %c0_i32_1 = arith.constant 0 : i32
    return %c0_i32, %c0_i32_0 : i32, i32
  }
  func.func @transform_6(%arg0: i32) -> (i32, i32) {
    %c0_i32 = arith.constant 0 : i32
    %c0_i32_0 = arith.constant 0 : i32
    %c0_i32_1 = arith.constant 0 : i32
    return %c0_i32, %c0_i32_0 : i32, i32
  }
  func.func @transform_7(%arg0: i32) -> (i32, i32) {
    %c0_i32 = arith.constant 0 : i32
    %c0_i32_0 = arith.constant 0 : i32
    return %arg0, %c0_i32 : i32, i32
  }
}

</mosaic_0001>

<llo_original>
// kernel: _lambda_.12
$region0: #{_lambda_.12}
  #allocation0 [shape = 'u32[]', space=smem, size = 0x4, offset = 0x4, fixed_abs, tag = 'smem constant byte address 0x4 - core index']
  #allocation1 [shape = 'u32[72,128]{1,0:T(1,128)}', space=vmem, size = 0x9000, scoped, tag = 'internal scratch']
  %s0 = inlined_call_operand.vmem [shape: f32[32,64], index: 0, kind: input, shape index: {}]
  %s1 = inlined_call_operand.vmem [shape: f32[1,64], index: 1, kind: input, shape index: {}]
  %s2 = inlined_call_operand.vmem [shape: f32[1,64], index: 2, kind: input, shape index: {}]
  %s3 = inlined_call_operand.vmem [shape: f32[1,64], index: 3, kind: input, shape index: {}]
  %s4 = inlined_call_operand.vmem [shape: f32[1,64], index: 4, kind: input, shape index: {}]
  %s5 = inlined_call_operand.vmem [shape: f32[32,64], index: 5, kind: output, shape index: {}]
  %s6 = sld [smem:[#allocation0]]
  $region30: #{_lambda_.12} parent=0
    _
  %s8 = ssub.s32 1, %s6
  %s9 = scalar_select 0, %s8, %s6
  // Predicated region
  $region2: #{_lambda_.12} parent=0 // pred_check
    _
  $region3: #{_lambda_.12} parent=0 // pred_check_branch
    %11 = sbr.rel (0) target = $region5
  $region4: #{_lambda_.12} parent=0 // pred_region
    _
  $region5: #{_lambda_.12} parent=0 // pred_fallthru
    _
  // Predicated region
  $region6: #{_lambda_.12} parent=0 // pred_check
    _
  $region7: #{_lambda_.12} parent=0 // pred_check_branch
    %13 = sbr.rel (0) target = $region9
  $region8: #{_lambda_.12} parent=0 // pred_region
    _
  $region9: #{_lambda_.12} parent=0 // pred_fallthru
    _
  // Predicated region
  $region10: #{_lambda_.12} parent=0 // pred_check
    _
  $region11: #{_lambda_.12} parent=0 // pred_check_branch
    %15 = sbr.rel (0) target = $region13
  $region12: #{_lambda_.12} parent=0 // pred_region
    _
  $region13: #{_lambda_.12} parent=0 // pred_fallthru
    _
  // Predicated region
  $region14: #{_lambda_.12} parent=0 // pred_check
    _
  $region15: #{_lambda_.12} parent=0 // pred_check_branch
    %17 = sbr.rel (0) target = $region17
  $region16: #{_lambda_.12} parent=0 // pred_region
    _
  $region17: #{_lambda_.12} parent=0 // pred_fallthru
    _
  // Predicated region
  $region18: #{_lambda_.12} parent=0 // pred_check
    _
  $region19: #{_lambda_.12} parent=0 // pred_check_branch
    %19 = sbr.rel (0) target = $region21
  $region20: #{_lambda_.12} parent=0 // pred_region
    _
  $region21: #{_lambda_.12} parent=0 // pred_fallthru
    _
  %v20 = vld [vmem:[%s0] sm:$0xff]
  %v21 = vld [vmem:[%s0 + $0x8] sm:$0xff]
  %v22 = vld [vmem:[%s0 + $0x10] sm:$0xff]
  %v23 = vld [vmem:[%s0 + $0x18] sm:$0xff]
  %v24 = vld [vmem:[%s1] sm:$0x1]
  %v25 = vld [vmem:[%s2] sm:$0x1]
  %v26 = vld [vmem:[%s3] sm:$0x1]
  %v27 = vld [vmem:[%s4] sm:$0x1]
  %v28 = vmul.f32 %v24, 0.03125
  %v29 = vmul.f32 %v25, 0.03125
  %v30 = vmul.f32 %v28, %v28
  %v31 = vsub.f32 %v29, %v30
  %v32 = vmax.f32 %v31, 0.0
  %v33 = vadd.f32 %v32, 1e-05
  %v34 = vrsqrt.pop %v33
  %v35 = vmul.f32 %v34, %v33
  %v36 = vmul.f32 %v35, %v34
  %v37 = vmul.f32 0.5, %v36
  %v38 = vsub.f32 1.5, %v37
  %v39 = vmul.f32 %v34, %v38
  %vm40 = vweird.f32 %v33
  %vm41 = vweird.f32 %v34
  %vm42 = vmor %vm40, %vm41
  %v43 = vsel %vm42, %v34, %v39
  %v45 = vperm.slane %v28, 0
  %v47 = vsub.f32 %v20, %v45
  %v48 = vsub.f32 %v21, %v45
  %v49 = vsub.f32 %v22, %v45
  %v50 = vsub.f32 %v23, %v45
  %v51 = vmul.f32 %v43, %v26
  %v53 = vperm.slane %v51, 0
  %v55 = vmul.f32 %v47, %v53
  %v56 = vmul.f32 %v48, %v53
  %v57 = vmul.f32 %v49, %v53
  %v58 = vmul.f32 %v50, %v53
  %v60 = vperm.slane %v27, 0
  %v62 = vadd.f32 %v55, %v60
  %v63 = vadd.f32 %v56, %v60
  %v64 = vadd.f32 %v57, %v60
  %v65 = vadd.f32 %v58, %v60
  %v66 = vmax.f32 %v62, 0.0
  %v67 = vmax.f32 %v63, 0.0
  %v68 = vmax.f32 %v64, 0.0
  %v69 = vmax.f32 %v65, 0.0
  %vm70 = vcmask 523264
  %71 = vst.msk [vmem:[%s5] sm:$0xff] %vm70, %v66
  %72 = vst.msk [vmem:[%s5 + $0x8] sm:$0xff] %vm70, %v67
  %73 = vst.msk [vmem:[%s5 + $0x10] sm:$0xff] %vm70, %v68
  %74 = vst.msk [vmem:[%s5 + $0x18] sm:$0xff] %vm70, %v69
  // Predicated region
  $region22: #{_lambda_.12} parent=0 // pred_check
    _
  $region23: #{_lambda_.12} parent=0 // pred_check_branch
    %76 = sbr.rel (0) target = $region25
  $region24: #{_lambda_.12} parent=0 // pred_region
    _
  $region25: #{_lambda_.12} parent=0 // pred_fallthru
    _
  // Predicated region
  $region26: #{_lambda_.12} parent=0 // pred_check
    _
  $region27: #{_lambda_.12} parent=0 // pred_check_branch
    %78 = sbr.rel (0) target = $region29
  $region28: #{_lambda_.12} parent=0 // pred_region
    _
  $region29: #{_lambda_.12} parent=0 // pred_fallthru
    _

// kernel: _lambda_.10
$region0: #{_lambda_.10}
  #allocation0 [shape = 'u32[]', space=smem, size = 0x4, offset = 0x4, fixed_abs, tag = 'smem constant byte address 0x4 - core index']
  #allocation1 [shape = 'u32[72,128]{1,0:T(1,128)}', space=vmem, size = 0x9000, scoped, tag = 'internal scratch']
  %s0 = inlined_call_operand.vmem [shape: f32[32,3], index: 0, kind: input, shape index: {}]
  %s1 = inlined_call_operand.vmem [shape: bf16[3,32], index: 1, kind: input, shape index: {}]
  %s2 = inlined_call_operand.vmem [shape: f32[32,32], index: 2, kind: output, shape index: {0}]
  %s3 = inlined_call_operand.vmem [shape: f32[1,32], index: 3, kind: output, shape index: {1}]
  %s4 = inlined_call_operand.vmem [shape: f32[1,32], index: 4, kind: output, shape index: {2}]
  %5 = xla_tuple %s2, %s3, %s4
  %s6 = sld [smem:[#allocation0]]
  $region38: #{_lambda_.10} parent=0
    _
  %s8 = ssub.s32 1, %s6
  %s9 = scalar_select 0, %s8, %s6
  // Predicated region
  $region2: #{_lambda_.10} parent=0 // pred_check
    _
  $region3: #{_lambda_.10} parent=0 // pred_check_branch
    %11 = sbr.rel (0) target = $region5
  $region4: #{_lambda_.10} parent=0 // pred_region
    _
  $region5: #{_lambda_.10} parent=0 // pred_fallthru
    _
  // Predicated region
  $region6: #{_lambda_.10} parent=0 // pred_check
    _
  $region7: #{_lambda_.10} parent=0 // pred_check_branch
    %13 = sbr.rel (0) target = $region9
  $region8: #{_lambda_.10} parent=0 // pred_region
    _
  $region9: #{_lambda_.10} parent=0 // pred_fallthru
    _
  %v15 = vld [vmem:[%s0] sm:$0xff]
  %v16 = vld [vmem:[%s0 + $0x8] sm:$0xff]
  %v17 = vld [vmem:[%s0 + $0x10] sm:$0xff]
  %v18 = vld [vmem:[%s0 + $0x18] sm:$0xff]
  %v19 = vpack.c.bf16 %v16, %v15
  %v20 = vpack.c.bf16 %v18, %v17
  %v21 = vld [vmem:[%s1] sm:$0x3]
  %vm22 = vcmask 23552
  %v24 = vsel %vm22, %v19, 0
  %v27 = vsel %vm22, %v20, 0
  %vm29 = vcmask 1040384
  %vm30 = vcmask 1041408
  %v31 = vsel %vm29, 4294967295, 65535
  %v32 = vsel %vm30, %v31, 0
  %v34 = vand.u32 %v21, %v32
  %36 = vmatpush.bf16.msra.mxu0 0
  %37 = vmatpush.bf16.msra.mxu0 0
  %38 = vmatpush.bf16.msra.mxu0 0
  %39 = vmatpush.bf16.msra.mxu0 0
  %40 = vmatpush.bf16.msra.mxu0 0
  %41 = vmatpush.bf16.msra.mxu0 0
  %42 = vmatpush.bf16.msra.mxu0 0
  %43 = vmatpush.bf16.msra.mxu0 %v34
  %44 = vmatmul.bf16.gmra.mxu0 %v24
  %v45 = vpop.f32.mrf.mxu0
  %v46 = vadd.f32 0.0, %v45
  %v47 = vpop.f32.mrf.mxu0
  %v48 = vadd.f32 0.0, %v47
  %49 = vmatmul.bf16.gmra.mxu0 %v27
  %v50 = vpop.f32.mrf.mxu0
  %v51 = vadd.f32 0.0, %v50
  %v52 = vpop.f32.mrf.mxu0
  %v53 = vadd.f32 0.0, %v52
  %54 = vdwg.mxu0
  %vm55 = vcmask 261120
  %56 = vst.msk [vmem:[%s2] sm:$0xff] %vm55, %v46
  %57 = vst.msk [vmem:[%s2 + $0x8] sm:$0xff] %vm55, %v48
  %58 = vst.msk [vmem:[%s2 + $0x10] sm:$0xff] %vm55, %v51
  %59 = vst.msk [vmem:[%s2 + $0x18] sm:$0xff] %vm55, %v53
  %p60 = scmp.eq.s32.totalorder 0, 0
  // Predicated region
  $region10: #{_lambda_.10} parent=0 // pred_check
    %p61 = pneg %p60
  $region11: #{_lambda_.10} parent=0 // pred_check_branch
    %63 = sbr.rel (%p61) target = $region13
  $region12: #{_lambda_.10} parent=0 // pred_region
    %vm64 = vcmask 253952
    %65 = vst.msk [vmem:[%s3] sm:$0x1] %vm64, 0.0
    %66 = vst.msk [vmem:[%s4] sm:$0x1] %vm64, 0.0
  $region13: #{_lambda_.10} parent=0 // pred_fallthru
    _
  %v67 = vld [vmem:[%s3] sm:$0x1]
  %v68 = vsel %vm55, %v46, 0.0
  %v69 = vsel %vm55, %v48, 0.0
  %v70 = vadd.f32 %v68, %v69
  %v71 = vsel %vm55, %v51, 0.0
  %v72 = vadd.f32 %v70, %v71
  %v73 = vsel %vm55, %v53, 0.0
  %v74 = vadd.f32 %v72, %v73
  %v75 = vrot.slane %v74, 4
  %v76 = vadd.f32 %v74, %v75
  %v77 = vrot.slane %v76, 2
  %v78 = vadd.f32 %v76, %v77
  %v79 = vrot.slane %v78, 1
  %v80 = vadd.f32 %v78, %v79
  %v81 = vadd.f32 %v67, %v80
  %vm82 = vcmask 253952
  %83 = vst.msk [vmem:[%s3] sm:$0x1] %vm82, %v81
  %v84 = vld [vmem:[%s4] sm:$0x1]
  %v85 = vmul.f32 %v46, %v46
  %v86 = vmul.f32 %v48, %v48
  %v87 = vmul.f32 %v51, %v51
  %v88 = vmul.f32 %v53, %v53
  %v89 = vsel %vm55, %v85, 0.0
  %v90 = vsel %vm55, %v86, 0.0
  %v91 = vadd.f32 %v89, %v90
  %v92 = vsel %vm55, %v87, 0.0
  %v93 = vadd.f32 %v91, %v92
  %v94 = vsel %vm55, %v88, 0.0
  %v95 = vadd.f32 %v93, %v94
  %v96 = vrot.slane %v95, 4
  %v97 = vadd.f32 %v95, %v96
  %v98 = vrot.slane %v97, 2
  %v99 = vadd.f32 %v97, %v98
  %v100 = vrot.slane %v99, 1
  %v101 = vadd.f32 %v99, %v100
  %v102 = vadd.f32 %v84, %v101
  %103 = vst.msk [vmem:[%s4] sm:$0x1] %vm82, %v102
  // Predicated region
  $region14: #{_lambda_.10} parent=0 // pred_check
    _
  $region15: #{_lambda_.10} parent=0 // pred_check_branch
    %105 = sbr.rel (0) target = $region17
  $region16: #{_lambda_.10} parent=0 // pred_region
    _
  $region17: #{_lambda_.10} parent=0 // pred_fallthru
    _
  // Predicated region
  $region18: #{_lambda_.10} parent=0 // pred_check
    _
  $region19: #{_lambda_.10} parent=0 // pred_check_branch
    %107 = sbr.rel (0) target = $region21
  $region20: #{_lambda_.10} parent=0 // pred_region
    _
  $region21: #{_lambda_.10} parent=0 // pred_fallthru
    _
  // Predicated region
  $region22: #{_lambda_.10} parent=0 // pred_check
    _
  $region23: #{_lambda_.10} parent=0 // pred_check_branch
    %109 = sbr.rel (0) target = $region25
  $region24: #{_lambda_.10} parent=0 // pred_region
    _
  $region25: #{_lambda_.10} parent=0 // pred_fallthru
    _
  // Predicated region
  $region26: #{_lambda_.10} parent=0 // pred_check
    _
  $region27: #{_lambda_.10} parent=0 // pred_check_branch
    %111 = sbr.rel (0) target = $region29
  $region28: #{_lambda_.10} parent=0 // pred_region
    _
  $region29: #{_lambda_.10} parent=0 // pred_fallthru
    _
  // Predicated region
  $region30: #{_lambda_.10} parent=0 // pred_check
    _
  $region31: #{_lambda_.10} parent=0 // pred_check_branch
    %113 = sbr.rel (0) target = $region33
  $region32: #{_lambda_.10} parent=0 // pred_region
    _
  $region33: #{_lambda_.10} parent=0 // pred_fallthru
    _
  // Predicated region
  $region34: #{_lambda_.10} parent=0 // pred_check
    _
  $region35: #{_lambda_.10} parent=0 // pred_check_branch
    %115 = sbr.rel (0) target = $region37
  $region36: #{_lambda_.10} parent=0 // pred_region
    _
  $region37: #{_lambda_.10} parent=0 // pred_fallthru
    _

// kernel: _lambda_.11
$region0: #{_lambda_.11}
  #allocation0 [shape = 'u32[]', space=smem, size = 0x4, offset = 0x4, fixed_abs, tag = 'smem constant byte address 0x4 - core index']
  #allocation1 [shape = 'u32[72,128]{1,0:T(1,128)}', space=vmem, size = 0x9000, scoped, tag = 'internal scratch']
  %s0 = inlined_call_operand.vmem [shape: f32[32,32], index: 0, kind: input, shape index: {}]
  %s1 = inlined_call_operand.vmem [shape: f32[1,32], index: 1, kind: input, shape index: {}]
  %s2 = inlined_call_operand.vmem [shape: f32[1,32], index: 2, kind: input, shape index: {}]
  %s3 = inlined_call_operand.vmem [shape: f32[1,32], index: 3, kind: input, shape index: {}]
  %s4 = inlined_call_operand.vmem [shape: f32[1,32], index: 4, kind: input, shape index: {}]
  %s5 = inlined_call_operand.vmem [shape: bf16[32,64], index: 5, kind: input, shape index: {}]
  %s6 = inlined_call_operand.vmem [shape: f32[32,64], index: 6, kind: output, shape index: {0}]
  %s7 = inlined_call_operand.vmem [shape: f32[1,64], index: 7, kind: output, shape index: {1}]
  %s8 = inlined_call_operand.vmem [shape: f32[1,64], index: 8, kind: output, shape index: {2}]
  %9 = xla_tuple %s6, %s7, %s8
  %s10 = sld [smem:[#allocation0]]
  $region54: #{_lambda_.11} parent=0
    _
  %s12 = ssub.s32 1, %s10
  %s13 = scalar_select 0, %s12, %s10
  // Predicated region
  $region2: #{_lambda_.11} parent=0 // pred_check
    _
  $region3: #{_lambda_.11} parent=0 // pred_check_branch
    %15 = sbr.rel (0) target = $region5
  $region4: #{_lambda_.11} parent=0 // pred_region
    _
  $region5: #{_lambda_.11} parent=0 // pred_fallthru
    _
  // Predicated region
  $region6: #{_lambda_.11} parent=0 // pred_check
    _
  $region7: #{_lambda_.11} parent=0 // pred_check_branch
    %17 = sbr.rel (0) target = $region9
  $region8: #{_lambda_.11} parent=0 // pred_region
    _
  $region9: #{_lambda_.11} parent=0 // pred_fallthru
    _
  // Predicated region
  $region10: #{_lambda_.11} parent=0 // pred_check
    _
  $region11: #{_lambda_.11} parent=0 // pred_check_branch
    %19 = sbr.rel (0) target = $region13
  $region12: #{_lambda_.11} parent=0 // pred_region
    _
  $region13: #{_lambda_.11} parent=0 // pred_fallthru
    _
  // Predicated region
  $region14: #{_lambda_.11} parent=0 // pred_check
    _
  $region15: #{_lambda_.11} parent=0 // pred_check_branch
    %21 = sbr.rel (0) target = $region17
  $region16: #{_lambda_.11} parent=0 // pred_region
    _
  $region17: #{_lambda_.11} parent=0 // pred_fallthru
    _
  // Predicated region
  $region18: #{_lambda_.11} parent=0 // pred_check
    _
  $region19: #{_lambda_.11} parent=0 // pred_check_branch
    %23 = sbr.rel (0) target = $region21
  $region20: #{_lambda_.11} parent=0 // pred_region
    _
  $region21: #{_lambda_.11} parent=0 // pred_fallthru
    _
  // Predicated region
  $region22: #{_lambda_.11} parent=0 // pred_check
    _
  $region23: #{_lambda_.11} parent=0 // pred_check_branch
    %25 = sbr.rel (0) target = $region25
  $region24: #{_lambda_.11} parent=0 // pred_region
    _
  $region25: #{_lambda_.11} parent=0 // pred_fallthru
    _
  %v27 = vld [vmem:[%s0] sm:$0xff]
  %v28 = vld [vmem:[%s0 + $0x8] sm:$0xff]
  %v29 = vld [vmem:[%s0 + $0x10] sm:$0xff]
  %v30 = vld [vmem:[%s0 + $0x18] sm:$0xff]
  %v31 = vld [vmem:[%s1] sm:$0x1]
  %v32 = vld [vmem:[%s2] sm:$0x1]
  %v33 = vld [vmem:[%s3] sm:$0x1]
  %v34 = vld [vmem:[%s4] sm:$0x1]
  %v35 = vmul.f32 %v31, 0.03125
  %v36 = vmul.f32 %v32, 0.03125
  %v37 = vmul.f32 %v35, %v35
  %v38 = vsub.f32 %v36, %v37
  %v39 = vmax.f32 %v38, 0.0
  %v40 = vadd.f32 %v39, 1e-05
  %v41 = vrsqrt.pop %v40
  %v42 = vmul.f32 %v41, %v40
  %v43 = vmul.f32 %v42, %v41
  %v44 = vmul.f32 0.5, %v43
  %v45 = vsub.f32 1.5, %v44
  %v46 = vmul.f32 %v41, %v45
  %vm47 = vweird.f32 %v40
  %vm48 = vweird.f32 %v41
  %vm49 = vmor %vm47, %vm48
  %v50 = vsel %vm49, %v41, %v46
  %v52 = vperm.slane %v35, 0
  %v54 = vsub.f32 %v27, %v52
  %v55 = vsub.f32 %v28, %v52
  %v56 = vsub.f32 %v29, %v52
  %v57 = vsub.f32 %v30, %v52
  %v58 = vmul.f32 %v50, %v33
  %v60 = vperm.slane %v58, 0
  %v62 = vmul.f32 %v54, %v60
  %v63 = vmul.f32 %v55, %v60
  %v64 = vmul.f32 %v56, %v60
  %v65 = vmul.f32 %v57, %v60
  %v67 = vperm.slane %v34, 0
  %v69 = vadd.f32 %v62, %v67
  %v70 = vadd.f32 %v63, %v67
  %v71 = vadd.f32 %v64, %v67
  %v72 = vadd.f32 %v65, %v67
  %v73 = vmax.f32 %v69, 0.0
  %v74 = vmax.f32 %v70, 0.0
  %v75 = vmax.f32 %v71, 0.0
  %v76 = vmax.f32 %v72, 0.0
  %v77 = vpack.c.bf16 %v74, %v73
  %v78 = vpack.c.bf16 %v76, %v75
  %v79 = vld [vmem:[%s5] sm:$0xf]
  %v80 = vld [vmem:[%s5 + $0x4] sm:$0xf]
  %v81 = vld [vmem:[%s5 + $0x8] sm:$0xf]
  %v82 = vld [vmem:[%s5 + $0xc] sm:$0xf]
  %v87 = vunpack.c.l.b16 %v79
  %v88 = vunpack.c.l.b16 %v80
  %v89 = vunpack.c.l.b16 %v81
  %v90 = vunpack.c.l.b16 %v82
  %v91 = vpack.c.b16 %v88, %v87
  %v92 = vpack.c.b16 %v90, %v89
  %vm95 = vcmask 261120
  %v97 = vsel %vm95, %v77, 0
  %v100 = vsel %vm95, %v78, 0
  %102 = vmatpush.bf16.msra.mxu0 0
  %103 = vmatpush.bf16.msra.mxu0 0
  %104 = vmatpush.bf16.msra.mxu0 0
  %105 = vmatpush.bf16.msra.mxu0 0
  %106 = vmatpush.bf16.msra.mxu0 0
  %107 = vmatpush.bf16.msra.mxu0 0
  %108 = vmatpush.bf16.msra.mxu0 %v92
  %109 = vmatpush.bf16.msra.mxu0 %v91
  %110 = vmatmul.bf16.gmra.mxu0 %v97
  %v111 = vpop.f32.mrf.mxu0
  %v112 = vadd.f32 0.0, %v111
  %v113 = vpop.f32.mrf.mxu0
  %v114 = vadd.f32 0.0, %v113
  %115 = vmatmul.bf16.gmra.mxu0 %v100
  %v116 = vpop.f32.mrf.mxu0
  %v117 = vadd.f32 0.0, %v116
  %v118 = vpop.f32.mrf.mxu0
  %v119 = vadd.f32 0.0, %v118
  %120 = vdwg.mxu0
  %vm121 = vcmask 523264
  %122 = vst.msk [vmem:[%s6] sm:$0xff] %vm121, %v112
  %123 = vst.msk [vmem:[%s6 + $0x8] sm:$0xff] %vm121, %v114
  %124 = vst.msk [vmem:[%s6 + $0x10] sm:$0xff] %vm121, %v117
  %125 = vst.msk [vmem:[%s6 + $0x18] sm:$0xff] %vm121, %v119
  %p126 = scmp.eq.s32.totalorder 0, 0
  // Predicated region
  $region26: #{_lambda_.11} parent=0 // pred_check
    %p127 = pneg %p126
  $region27: #{_lambda_.11} parent=0 // pred_check_branch
    %129 = sbr.rel (%p127) target = $region29
  $region28: #{_lambda_.11} parent=0 // pred_region
    %vm130 = vcmask 516096
    %131 = vst.msk [vmem:[%s7] sm:$0x1] %vm130, 0.0
    %132 = vst.msk [vmem:[%s8] sm:$0x1] %vm130, 0.0
  $region29: #{_lambda_.11} parent=0 // pred_fallthru
    _
  %v133 = vld [vmem:[%s7] sm:$0x1]
  %v134 = vsel %vm121, %v112, 0.0
  %v135 = vsel %vm121, %v114, 0.0
  %v136 = vadd.f32 %v134, %v135
  %v137 = vsel %vm121, %v117, 0.0
  %v138 = vadd.f32 %v136, %v137
  %v139 = vsel %vm121, %v119, 0.0
  %v140 = vadd.f32 %v138, %v139
  %v141 = vrot.slane %v140, 4
  %v142 = vadd.f32 %v140, %v141
  %v143 = vrot.slane %v142, 2
  %v144 = vadd.f32 %v142, %v143
  %v145 = vrot.slane %v144, 1
  %v146 = vadd.f32 %v144, %v145
  %v147 = vadd.f32 %v133, %v146
  %vm148 = vcmask 516096
  %149 = vst.msk [vmem:[%s7] sm:$0x1] %vm148, %v147
  %v150 = vld [vmem:[%s8] sm:$0x1]
  %v151 = vmul.f32 %v112, %v112
  %v152 = vmul.f32 %v114, %v114
  %v153 = vmul.f32 %v117, %v117
  %v154 = vmul.f32 %v119, %v119
  %v155 = vsel %vm121, %v151, 0.0
  %v156 = vsel %vm121, %v152, 0.0
  %v157 = vadd.f32 %v155, %v156
  %v158 = vsel %vm121, %v153, 0.0
  %v159 = vadd.f32 %v157, %v158
  %v160 = vsel %vm121, %v154, 0.0
  %v161 = vadd.f32 %v159, %v160
  %v162 = vrot.slane %v161, 4
  %v163 = vadd.f32 %v161, %v162
  %v164 = vrot.slane %v163, 2
  %v165 = vadd.f32 %v163, %v164
  %v166 = vrot.slane %v165, 1
  %v167 = vadd.f32 %v165, %v166
  %v168 = vadd.f32 %v150, %v167
  %169 = vst.msk [vmem:[%s8] sm:$0x1] %vm148, %v168
  // Predicated region
  $region30: #{_lambda_.11} parent=0 // pred_check
    _
  $region31: #{_lambda_.11} parent=0 // pred_check_branch
    %171 = sbr.rel (0) target = $region33
  $region32: #{_lambda_.11} parent=0 // pred_region
    _
  $region33: #{_lambda_.11} parent=0 // pred_fallthru
    _
  // Predicated region
  $region34: #{_lambda_.11} parent=0 // pred_check
    _
  $region35: #{_lambda_.11} parent=0 // pred_check_branch
    %173 = sbr.rel (0) target = $region37
  $region36: #{_lambda_.11} parent=0 // pred_region
    _
  $region37: #{_lambda_.11} parent=0 // pred_fallthru
    _
  // Predicated region
  $region38: #{_lambda_.11} parent=0 // pred_check
    _
  $region39: #{_lambda_.11} parent=0 // pred_check_branch
    %175 = sbr.rel (0) target = $region41
  $region40: #{_lambda_.11} parent=0 // pred_region
    _
  $region41: #{_lambda_.11} parent=0 // pred_fallthru
    _
  // Predicated region
  $region42: #{_lambda_.11} parent=0 // pred_check
    _
  $region43: #{_lambda_.11} parent=0 // pred_check_branch
    %177 = sbr.rel (0) target = $region45
  $region44: #{_lambda_.11} parent=0 // pred_region
    _
  $region45: #{_lambda_.11} parent=0 // pred_fallthru
    _
  // Predicated region
  $region46: #{_lambda_.11} parent=0 // pred_check
    _
  $region47: #{_lambda_.11} parent=0 // pred_check_branch
    %179 = sbr.rel (0) target = $region49
  $region48: #{_lambda_.11} parent=0 // pred_region
    _
  $region49: #{_lambda_.11} parent=0 // pred_fallthru
    _
  // Predicated region
  $region50: #{_lambda_.11} parent=0 // pred_check
    _
  $region51: #{_lambda_.11} parent=0 // pred_check_branch
    %181 = sbr.rel (0) target = $region53
  $region52: #{_lambda_.11} parent=0 // pred_region
    _
  $region53: #{_lambda_.11} parent=0 // pred_fallthru
    _

// kernel: _lambda_.13
$region0: #{_lambda_.13}
  #allocation0 [shape = 'u32[]', space=smem, size = 0x4, offset = 0x4, fixed_abs, tag = 'smem constant byte address 0x4 - core index']
  #allocation1 [shape = 'u32[72,128]{1,0:T(1,128)}', space=vmem, size = 0x9000, scoped, tag = 'internal scratch']
  %s0 = inlined_call_operand.vmem [shape: f32[8,64], index: 0, kind: input, shape index: {}]
  %s1 = inlined_call_operand.vmem [shape: bf16[64,32], index: 1, kind: input, shape index: {}]
  %s2 = inlined_call_operand.vmem [shape: f32[8,32], index: 2, kind: output, shape index: {0}]
  %s3 = inlined_call_operand.vmem [shape: f32[1,32], index: 3, kind: output, shape index: {1}]
  %s4 = inlined_call_operand.vmem [shape: f32[1,32], index: 4, kind: output, shape index: {2}]
  %5 = xla_tuple %s2, %s3, %s4
  %s6 = sld [smem:[#allocation0]]
  $region38: #{_lambda_.13} parent=0
    _
  %s8 = ssub.s32 1, %s6
  %s9 = scalar_select 0, %s8, %s6
  // Predicated region
  $region2: #{_lambda_.13} parent=0 // pred_check
    _
  $region3: #{_lambda_.13} parent=0 // pred_check_branch
    %11 = sbr.rel (0) target = $region5
  $region4: #{_lambda_.13} parent=0 // pred_region
    _
  $region5: #{_lambda_.13} parent=0 // pred_fallthru
    _
  // Predicated region
  $region6: #{_lambda_.13} parent=0 // pred_check
    _
  $region7: #{_lambda_.13} parent=0 // pred_check_branch
    %13 = sbr.rel (0) target = $region9
  $region8: #{_lambda_.13} parent=0 // pred_region
    _
  $region9: #{_lambda_.13} parent=0 // pred_fallthru
    _
  %v15 = vld [vmem:[%s0] sm:$0xff]
  %v16 = vpack.c.bf16 %v15, %v15
  %v17 = vld [vmem:[%s1] sm:$0xf]
  %v18 = vld [vmem:[%s1 + $0x4] sm:$0xf]
  %v19 = vld [vmem:[%s1 + $0x8] sm:$0xf]
  %v20 = vld [vmem:[%s1 + $0xc] sm:$0xf]
  %v21 = vld [vmem:[%s1 + $0x10] sm:$0xf]
  %v22 = vld [vmem:[%s1 + $0x14] sm:$0xf]
  %v23 = vld [vmem:[%s1 + $0x18] sm:$0xf]
  %v24 = vld [vmem:[%s1 + $0x1c] sm:$0xf]
  %v33 = vunpack.c.l.b16 %v17
  %v34 = vunpack.c.l.b16 %v18
  %v35 = vunpack.c.l.b16 %v19
  %v36 = vunpack.c.l.b16 %v20
  %v37 = vunpack.c.l.b16 %v21
  %v38 = vunpack.c.l.b16 %v22
  %v39 = vunpack.c.l.b16 %v23
  %v40 = vunpack.c.l.b16 %v24
  %v41 = vpack.c.b16 %v34, %v33
  %v42 = vpack.c.b16 %v36, %v35
  %v43 = vpack.c.b16 %v38, %v37
  %v44 = vpack.c.b16 %v40, %v39
  %vm49 = vcmask 523264
  %v51 = vsel %vm49, %v16, 0
  %53 = vmatpush.bf16.msra.mxu0 0
  %54 = vmatpush.bf16.msra.mxu0 0
  %55 = vmatpush.bf16.msra.mxu0 0
  %56 = vmatpush.bf16.msra.mxu0 0
  %57 = vmatpush.bf16.msra.mxu0 %v44
  %58 = vmatpush.bf16.msra.mxu0 %v43
  %59 = vmatpush.bf16.msra.mxu0 %v42
  %60 = vmatpush.bf16.msra.mxu0 %v41
  %61 = vmatmul.bf16.gmra.mxu0 %v51
  %v62 = vpop.f32.mrf.mxu0
  %v63 = vadd.f32 0.0, %v62
  %v64 = vpop.f32.mrf.mxu0
  %65 = vdwg.mxu0
  %vm66 = vcmask 261120
  %67 = vst.msk [vmem:[%s2] sm:$0xff] %vm66, %v63
  %p68 = scmp.eq.s32.totalorder 0, 0
  // Predicated region
  $region10: #{_lambda_.13} parent=0 // pred_check
    %p69 = pneg %p68
  $region11: #{_lambda_.13} parent=0 // pred_check_branch
    %71 = sbr.rel (%p69) target = $region13
  $region12: #{_lambda_.13} parent=0 // pred_region
    %vm72 = vcmask 253952
    %73 = vst.msk [vmem:[%s3] sm:$0x1] %vm72, 0.0
    %74 = vst.msk [vmem:[%s4] sm:$0x1] %vm72, 0.0
  $region13: #{_lambda_.13} parent=0 // pred_fallthru
    _
  %s75 = smul.u32 0, 8
  %v76 = vlaneseq
  %v77 = vshrl.u32 %v76, 7
  %v78 = vstv %s75
  %v79 = vadd.s32 %v78, %v77
  %vm80 = vcmp.lt.s32.totalorder %v79, 2
  %v81 = vsel %vm80, 1, 0
  %v82 = vcvt.s32.f32 %v81
  %v83 = vmul.f32 %v63, %v82
  %v84 = vld [vmem:[%s3] sm:$0x1]
  %v85 = vsel %vm66, %v83, 0.0
  %v86 = vrot.slane %v85, 4
  %v87 = vadd.f32 %v85, %v86
  %v88 = vrot.slane %v87, 2
  %v89 = vadd.f32 %v87, %v88
  %v90 = vrot.slane %v89, 1
  %v91 = vadd.f32 %v89, %v90
  %v92 = vadd.f32 %v84, %v91
  %vm93 = vcmask 253952
  %94 = vst.msk [vmem:[%s3] sm:$0x1] %vm93, %v92
  %v95 = vld [vmem:[%s4] sm:$0x1]
  %v96 = vmul.f32 %v83, %v83
  %v97 = vsel %vm66, %v96, 0.0
  %v98 = vrot.slane %v97, 4
  %v99 = vadd.f32 %v97, %v98
  %v100 = vrot.slane %v99, 2
  %v101 = vadd.f32 %v99, %v100
  %v102 = vrot.slane %v101, 1
  %v103 = vadd.f32 %v101, %v102
  %v104 = vadd.f32 %v95, %v103
  %105 = vst.msk [vmem:[%s4] sm:$0x1] %vm93, %v104
  // Predicated region
  $region14: #{_lambda_.13} parent=0 // pred_check
    _
  $region15: #{_lambda_.13} parent=0 // pred_check_branch
    %107 = sbr.rel (0) target = $region17
  $region16: #{_lambda_.13} parent=0 // pred_region
    _
  $region17: #{_lambda_.13} parent=0 // pred_fallthru
    _
  // Predicated region
  $region18: #{_lambda_.13} parent=0 // pred_check
    _
  $region19: #{_lambda_.13} parent=0 // pred_check_branch
    %109 = sbr.rel (0) target = $region21
  $region20: #{_lambda_.13} parent=0 // pred_region
    _
  $region21: #{_lambda_.13} parent=0 // pred_fallthru
    _
  // Predicated region
  $region22: #{_lambda_.13} parent=0 // pred_check
    _
  $region23: #{_lambda_.13} parent=0 // pred_check_branch
    %111 = sbr.rel (0) target = $region25
  $region24: #{_lambda_.13} parent=0 // pred_region
    _
  $region25: #{_lambda_.13} parent=0 // pred_fallthru
    _
  // Predicated region
  $region26: #{_lambda_.13} parent=0 // pred_check
    _
  $region27: #{_lambda_.13} parent=0 // pred_check_branch
    %113 = sbr.rel (0) target = $region29
  $region28: #{_lambda_.13} parent=0 // pred_region
    _
  $region29: #{_lambda_.13} parent=0 // pred_fallthru
    _
  // Predicated region
  $region30: #{_lambda_.13} parent=0 // pred_check
    _
  $region31: #{_lambda_.13} parent=0 // pred_check_branch
    %115 = sbr.rel (0) target = $region33
  $region32: #{_lambda_.13} parent=0 // pred_region
    _
  $region33: #{_lambda_.13} parent=0 // pred_fallthru
    _
  // Predicated region
  $region34: #{_lambda_.13} parent=0 // pred_check
    _
  $region35: #{_lambda_.13} parent=0 // pred_check_branch
    %117 = sbr.rel (0) target = $region37
  $region36: #{_lambda_.13} parent=0 // pred_region
    _
  $region37: #{_lambda_.13} parent=0 // pred_fallthru
    _

// kernel: _lambda_.14
$region0: #{_lambda_.14}
  #allocation0 [shape = 'u32[]', space=smem, size = 0x4, offset = 0x4, fixed_abs, tag = 'smem constant byte address 0x4 - core index']
  #allocation1 [shape = 'u32[72,128]{1,0:T(1,128)}', space=vmem, size = 0x9000, scoped, tag = 'internal scratch']
  %s0 = inlined_call_operand.vmem [shape: f32[8,32], index: 0, kind: input, shape index: {}]
  %s1 = inlined_call_operand.vmem [shape: f32[1,32], index: 1, kind: input, shape index: {}]
  %s2 = inlined_call_operand.vmem [shape: f32[1,32], index: 2, kind: input, shape index: {}]
  %s3 = inlined_call_operand.vmem [shape: f32[1,32], index: 3, kind: input, shape index: {}]
  %s4 = inlined_call_operand.vmem [shape: f32[1,32], index: 4, kind: input, shape index: {}]
  %s5 = inlined_call_operand.vmem [shape: bf16[32,9], index: 5, kind: input, shape index: {}]
  %s6 = inlined_call_operand.vmem [shape: f32[1,9], index: 6, kind: input, shape index: {}]
  %s7 = inlined_call_operand.vmem [shape: f32[8,9], index: 7, kind: output, shape index: {}]
  %s8 = sld [smem:[#allocation0]]
  $region38: #{_lambda_.14} parent=0
    _
  %s10 = ssub.s32 1, %s8
  %s11 = scalar_select 0, %s10, %s8
  // Predicated region
  $region2: #{_lambda_.14} parent=0 // pred_check
    _
  $region3: #{_lambda_.14} parent=0 // pred_check_branch
    %13 = sbr.rel (0) target = $region5
  $region4: #{_lambda_.14} parent=0 // pred_region
    _
  $region5: #{_lambda_.14} parent=0 // pred_fallthru
    _
  // Predicated region
  $region6: #{_lambda_.14} parent=0 // pred_check
    _
  $region7: #{_lambda_.14} parent=0 // pred_check_branch
    %15 = sbr.rel (0) target = $region9
  $region8: #{_lambda_.14} parent=0 // pred_region
    _
  $region9: #{_lambda_.14} parent=0 // pred_fallthru
    _
  // Predicated region
  $region10: #{_lambda_.14} parent=0 // pred_check
    _
  $region11: #{_lambda_.14} parent=0 // pred_check_branch
    %17 = sbr.rel (0) target = $region13
  $region12: #{_lambda_.14} parent=0 // pred_region
    _
  $region13: #{_lambda_.14} parent=0 // pred_fallthru
    _
  // Predicated region
  $region14: #{_lambda_.14} parent=0 // pred_check
    _
  $region15: #{_lambda_.14} parent=0 // pred_check_branch
    %19 = sbr.rel (0) target = $region17
  $region16: #{_lambda_.14} parent=0 // pred_region
    _
  $region17: #{_lambda_.14} parent=0 // pred_fallthru
    _
  // Predicated region
  $region18: #{_lambda_.14} parent=0 // pred_check
    _
  $region19: #{_lambda_.14} parent=0 // pred_check_branch
    %21 = sbr.rel (0) target = $region21
  $region20: #{_lambda_.14} parent=0 // pred_region
    _
  $region21: #{_lambda_.14} parent=0 // pred_fallthru
    _
  // Predicated region
  $region22: #{_lambda_.14} parent=0 // pred_check
    _
  $region23: #{_lambda_.14} parent=0 // pred_check_branch
    %23 = sbr.rel (0) target = $region25
  $region24: #{_lambda_.14} parent=0 // pred_region
    _
  $region25: #{_lambda_.14} parent=0 // pred_fallthru
    _
  // Predicated region
  $region26: #{_lambda_.14} parent=0 // pred_check
    _
  $region27: #{_lambda_.14} parent=0 // pred_check_branch
    %25 = sbr.rel (0) target = $region29
  $region28: #{_lambda_.14} parent=0 // pred_region
    _
  $region29: #{_lambda_.14} parent=0 // pred_fallthru
    _
  %v27 = vld [vmem:[%s0] sm:$0xff]
  %v28 = vld [vmem:[%s1] sm:$0x1]
  %v29 = vld [vmem:[%s2] sm:$0x1]
  %v30 = vld [vmem:[%s3] sm:$0x1]
  %v31 = vld [vmem:[%s4] sm:$0x1]
  %v32 = vmul.f32 %v28, 0.5
  %v33 = vmul.f32 %v29, 0.5
  %v34 = vmul.f32 %v32, %v32
  %v35 = vsub.f32 %v33, %v34
  %v36 = vmax.f32 %v35, 0.0
  %v37 = vadd.f32 %v36, 1e-05
  %v38 = vrsqrt.pop %v37
  %v39 = vmul.f32 %v38, %v37
  %v40 = vmul.f32 %v39, %v38
  %v41 = vmul.f32 0.5, %v40
  %v42 = vsub.f32 1.5, %v41
  %v43 = vmul.f32 %v38, %v42
  %vm44 = vweird.f32 %v37
  %vm45 = vweird.f32 %v38
  %vm46 = vmor %vm44, %vm45
  %v47 = vsel %vm46, %v38, %v43
  %v49 = vperm.slane %v32, 0
  %v51 = vsub.f32 %v27, %v49
  %v52 = vmul.f32 %v47, %v30
  %v54 = vperm.slane %v52, 0
  %v56 = vmul.f32 %v51, %v54
  %v58 = vperm.slane %v31, 0
  %v60 = vadd.f32 %v56, %v58
  %v61 = vmax.f32 %v60, 0.0
  %v62 = vpack.c.bf16 %v61, %v61
  %v63 = vld [vmem:[%s5] sm:$0xf]
  %v64 = vld [vmem:[%s5 + $0x4] sm:$0xf]
  %v65 = vld [vmem:[%s5 + $0x8] sm:$0xf]
  %v66 = vld [vmem:[%s5 + $0xc] sm:$0xf]
  %v67 = vld [vmem:[%s6] sm:$0x1]
  %v69 = vperm.slane %v67, 0
  %v75 = vunpack.c.l.b16 %v63
  %v76 = vunpack.c.l.b16 %v64
  %v77 = vunpack.c.l.b16 %v65
  %v78 = vunpack.c.l.b16 %v66
  %v79 = vpack.c.b16 %v76, %v75
  %v80 = vpack.c.b16 %v78, %v77
  %vm83 = vcmask 261120
  %v85 = vsel %vm83, %v62, 0
  %87 = vmatpush.bf16.msra.mxu0 0
  %88 = vmatpush.bf16.msra.mxu0 0
  %89 = vmatpush.bf16.msra.mxu0 0
  %90 = vmatpush.bf16.msra.mxu0 0
  %91 = vmatpush.bf16.msra.mxu0 0
  %92 = vmatpush.bf16.msra.mxu0 0
  %93 = vmatpush.bf16.msra.mxu0 %v80
  %94 = vmatpush.bf16.msra.mxu0 %v79
  %95 = vmatmul.bf16.gmra.mxu0 %v85
  %v96 = vpop.f32.mrf.mxu0
  %v97 = vadd.f32 %v69, %v96
  %v98 = vpop.f32.mrf.mxu0
  %99 = vdwg.mxu0
  %vm100 = vcmask 72704
  %101 = vst.msk [vmem:[%s7] sm:$0xff] %vm100, %v97
  // Predicated region
  $region30: #{_lambda_.14} parent=0 // pred_check
    _
  $region31: #{_lambda_.14} parent=0 // pred_check_branch
    %103 = sbr.rel (0) target = $region33
  $region32: #{_lambda_.14} parent=0 // pred_region
    _
  $region33: #{_lambda_.14} parent=0 // pred_fallthru
    _
  // Predicated region
  $region34: #{_lambda_.14} parent=0 // pred_check
    _
  $region35: #{_lambda_.14} parent=0 // pred_check_branch
    %105 = sbr.rel (0) target = $region37
  $region36: #{_lambda_.14} parent=0 // pred_region
    _
  $region37: #{_lambda_.14} parent=0 // pred_fallthru
    _

// kernel: _lambda_.18
$region0: #{_lambda_.18}
  #allocation0 [shape = 'u32[]', space=smem, size = 0x4, offset = 0x4, fixed_abs, tag = 'smem constant byte address 0x4 - core index']
  #allocation1 [shape = 'u32[72,128]{1,0:T(1,128)}', space=vmem, size = 0x9000, scoped, tag = 'internal scratch']
  %s0 = inlined_call_operand.vmem [shape: f32[32,128], index: 0, kind: input, shape index: {}]
  %s1 = inlined_call_operand.vmem [shape: bf16[128,64], index: 1, kind: input, shape index: {}]
  %s2 = inlined_call_operand.vmem [shape: f32[32,64], index: 2, kind: output, shape index: {0}]
  %s3 = inlined_call_operand.vmem [shape: f32[1,64], index: 3, kind: output, shape index: {1}]
  %s4 = inlined_call_operand.vmem [shape: f32[1,64], index: 4, kind: output, shape index: {2}]
  %5 = xla_tuple %s2, %s3, %s4
  %s6 = sld [smem:[#allocation0]]
  $region38: #{_lambda_.18} parent=0
    _
  %s8 = ssub.s32 1, %s6
  %s9 = scalar_select 0, %s8, %s6
  // Predicated region
  $region2: #{_lambda_.18} parent=0 // pred_check
    _
  $region3: #{_lambda_.18} parent=0 // pred_check_branch
    %11 = sbr.rel (0) target = $region5
  $region4: #{_lambda_.18} parent=0 // pred_region
    _
  $region5: #{_lambda_.18} parent=0 // pred_fallthru
    _
  // Predicated region
  $region6: #{_lambda_.18} parent=0 // pred_check
    _
  $region7: #{_lambda_.18} parent=0 // pred_check_branch
    %13 = sbr.rel (0) target = $region9
  $region8: #{_lambda_.18} parent=0 // pred_region
    _
  $region9: #{_lambda_.18} parent=0 // pred_fallthru
    _
  %v14 = vld [vmem:[%s0] sm:$0xff]
  %v15 = vld [vmem:[%s0 + $0x8] sm:$0xff]
  %v16 = vld [vmem:[%s0 + $0x10] sm:$0xff]
  %v17 = vld [vmem:[%s0 + $0x18] sm:$0xff]
  %v18 = vpack.c.bf16 %v15, %v14
  %v19 = vpack.c.bf16 %v17, %v16
  %v20 = vld [vmem:[%s1] sm:$0xf]
  %v21 = vld [vmem:[%s1 + $0x4] sm:$0xf]
  %v22 = vld [vmem:[%s1 + $0x8] sm:$0xf]
  %v23 = vld [vmem:[%s1 + $0xc] sm:$0xf]
  %v24 = vld [vmem:[%s1 + $0x10] sm:$0xf]
  %v25 = vld [vmem:[%s1 + $0x14] sm:$0xf]
  %v26 = vld [vmem:[%s1 + $0x18] sm:$0xf]
  %v27 = vld [vmem:[%s1 + $0x1c] sm:$0xf]
  %v28 = vld [vmem:[%s1 + $0x20] sm:$0xf]
  %v29 = vld [vmem:[%s1 + $0x24] sm:$0xf]
  %v30 = vld [vmem:[%s1 + $0x28] sm:$0xf]
  %v31 = vld [vmem:[%s1 + $0x2c] sm:$0xf]
  %v32 = vld [vmem:[%s1 + $0x30] sm:$0xf]
  %v33 = vld [vmem:[%s1 + $0x34] sm:$0xf]
  %v34 = vld [vmem:[%s1 + $0x38] sm:$0xf]
  %v35 = vld [vmem:[%s1 + $0x3c] sm:$0xf]
  %v52 = vunpack.c.l.b16 %v20
  %v53 = vunpack.c.l.b16 %v21
  %v54 = vunpack.c.l.b16 %v22
  %v55 = vunpack.c.l.b16 %v23
  %v56 = vunpack.c.l.b16 %v24
  %v57 = vunpack.c.l.b16 %v25
  %v58 = vunpack.c.l.b16 %v26
  %v59 = vunpack.c.l.b16 %v27
  %v60 = vunpack.c.l.b16 %v28
  %v61 = vunpack.c.l.b16 %v29
  %v62 = vunpack.c.l.b16 %v30
  %v63 = vunpack.c.l.b16 %v31
  %v64 = vunpack.c.l.b16 %v32
  %v65 = vunpack.c.l.b16 %v33
  %v66 = vunpack.c.l.b16 %v34
  %v67 = vunpack.c.l.b16 %v35
  %v68 = vpack.c.b16 %v53, %v52
  %v69 = vpack.c.b16 %v55, %v54
  %v70 = vpack.c.b16 %v57, %v56
  %v71 = vpack.c.b16 %v59, %v58
  %v72 = vpack.c.b16 %v61, %v60
  %v73 = vpack.c.b16 %v63, %v62
  %v74 = vpack.c.b16 %v65, %v64
  %v75 = vpack.c.b16 %v67, %v66
  %84 = vmatpush.bf16.msra.mxu0 %v75
  %85 = vmatpush.bf16.msra.mxu0 %v74
  %86 = vmatpush.bf16.msra.mxu0 %v73
  %87 = vmatpush.bf16.msra.mxu0 %v72
  %88 = vmatpush.bf16.msra.mxu0 %v71
  %89 = vmatpush.bf16.msra.mxu0 %v70
  %90 = vmatpush.bf16.msra.mxu0 %v69
  %91 = vmatpush.bf16.msra.mxu0 %v68
  %92 = vmatmul.bf16.gmra.mxu0 %v18
  %v93 = vpop.f32.mrf.mxu0
  %v94 = vadd.f32 0.0, %v93
  %v95 = vpop.f32.mrf.mxu0
  %v96 = vadd.f32 0.0, %v95
  %97 = vmatmul.bf16.gmra.mxu0 %v19
  %v98 = vpop.f32.mrf.mxu0
  %v99 = vadd.f32 0.0, %v98
  %v100 = vpop.f32.mrf.mxu0
  %v101 = vadd.f32 0.0, %v100
  %102 = vdwg.mxu0
  %vm103 = vcmask 523264
  %104 = vst.msk [vmem:[%s2] sm:$0xff] %vm103, %v94
  %105 = vst.msk [vmem:[%s2 + $0x8] sm:$0xff] %vm103, %v96
  %106 = vst.msk [vmem:[%s2 + $0x10] sm:$0xff] %vm103, %v99
  %107 = vst.msk [vmem:[%s2 + $0x18] sm:$0xff] %vm103, %v101
  %p108 = scmp.eq.s32.totalorder 0, 0
  // Predicated region
  $region10: #{_lambda_.18} parent=0 // pred_check
    %p109 = pneg %p108
  $region11: #{_lambda_.18} parent=0 // pred_check_branch
    %111 = sbr.rel (%p109) target = $region13
  $region12: #{_lambda_.18} parent=0 // pred_region
    %vm112 = vcmask 516096
    %113 = vst.msk [vmem:[%s3] sm:$0x1] %vm112, 0.0
    %114 = vst.msk [vmem:[%s4] sm:$0x1] %vm112, 0.0
  $region13: #{_lambda_.18} parent=0 // pred_fallthru
    _
  %v115 = vld [vmem:[%s3] sm:$0x1]
  %v116 = vsel %vm103, %v94, 0.0
  %v117 = vsel %vm103, %v96, 0.0
  %v118 = vadd.f32 %v116, %v117
  %v119 = vsel %vm103, %v99, 0.0
  %v120 = vadd.f32 %v118, %v119
  %v121 = vsel %vm103, %v101, 0.0
  %v122 = vadd.f32 %v120, %v121
  %v123 = vrot.slane %v122, 4
  %v124 = vadd.f32 %v122, %v123
  %v125 = vrot.slane %v124, 2
  %v126 = vadd.f32 %v124, %v125
  %v127 = vrot.slane %v126, 1
  %v128 = vadd.f32 %v126, %v127
  %v129 = vadd.f32 %v115, %v128
  %vm130 = vcmask 516096
  %131 = vst.msk [vmem:[%s3] sm:$0x1] %vm130, %v129
  %v132 = vld [vmem:[%s4] sm:$0x1]
  %v133 = vmul.f32 %v94, %v94
  %v134 = vmul.f32 %v96, %v96
  %v135 = vmul.f32 %v99, %v99
  %v136 = vmul.f32 %v101, %v101
  %v137 = vsel %vm103, %v133, 0.0
  %v138 = vsel %vm103, %v134, 0.0
  %v139 = vadd.f32 %v137, %v138
  %v140 = vsel %vm103, %v135, 0.0
  %v141 = vadd.f32 %v139, %v140
  %v142 = vsel %vm103, %v136, 0.0
  %v143 = vadd.f32 %v141, %v142
  %v144 = vrot.slane %v143, 4
  %v145 = vadd.f32 %v143, %v144
  %v146 = vrot.slane %v145, 2
  %v147 = vadd.f32 %v145, %v146
  %v148 = vrot.slane %v147, 1
  %v149 = vadd.f32 %v147, %v148
  %v150 = vadd.f32 %v132, %v149
  %151 = vst.msk [vmem:[%s4] sm:$0x1] %vm130, %v150
  // Predicated region
  $region14: #{_lambda_.18} parent=0 // pred_check
    _
  $region15: #{_lambda_.18} parent=0 // pred_check_branch
    %153 = sbr.rel (0) target = $region17
  $region16: #{_lambda_.18} parent=0 // pred_region
    _
  $region17: #{_lambda_.18} parent=0 // pred_fallthru
    _
  // Predicated region
  $region18: #{_lambda_.18} parent=0 // pred_check
    _
  $region19: #{_lambda_.18} parent=0 // pred_check_branch
    %155 = sbr.rel (0) target = $region21
  $region20: #{_lambda_.18} parent=0 // pred_region
    _
  $region21: #{_lambda_.18} parent=0 // pred_fallthru
    _
  // Predicated region
  $region22: #{_lambda_.18} parent=0 // pred_check
    _
  $region23: #{_lambda_.18} parent=0 // pred_check_branch
    %157 = sbr.rel (0) target = $region25
  $region24: #{_lambda_.18} parent=0 // pred_region
    _
  $region25: #{_lambda_.18} parent=0 // pred_fallthru
    _
  // Predicated region
  $region26: #{_lambda_.18} parent=0 // pred_check
    _
  $region27: #{_lambda_.18} parent=0 // pred_check_branch
    %159 = sbr.rel (0) target = $region29
  $region28: #{_lambda_.18} parent=0 // pred_region
    _
  $region29: #{_lambda_.18} parent=0 // pred_fallthru
    _
  // Predicated region
  $region30: #{_lambda_.18} parent=0 // pred_check
    _
  $region31: #{_lambda_.18} parent=0 // pred_check_branch
    %161 = sbr.rel (0) target = $region33
  $region32: #{_lambda_.18} parent=0 // pred_region
    _
  $region33: #{_lambda_.18} parent=0 // pred_fallthru
    _
  // Predicated region
  $region34: #{_lambda_.18} parent=0 // pred_check
    _
  $region35: #{_lambda_.18} parent=0 // pred_check_branch
    %163 = sbr.rel (0) target = $region37
  $region36: #{_lambda_.18} parent=0 // pred_region
    _
  $region37: #{_lambda_.18} parent=0 // pred_fallthru
    _

// kernel: _lambda_.19
$region0: #{_lambda_.19}
  #allocation0 [shape = 'u32[]', space=smem, size = 0x4, offset = 0x4, fixed_abs, tag = 'smem constant byte address 0x4 - core index']
  #allocation1 [shape = 'u32[72,128]{1,0:T(1,128)}', space=vmem, size = 0x9000, scoped, tag = 'internal scratch']
  %s0 = inlined_call_operand.vmem [shape: f32[32,64], index: 0, kind: input, shape index: {}]
  %s1 = inlined_call_operand.vmem [shape: f32[1,64], index: 1, kind: input, shape index: {}]
  %s2 = inlined_call_operand.vmem [shape: f32[1,64], index: 2, kind: input, shape index: {}]
  %s3 = inlined_call_operand.vmem [shape: f32[1,64], index: 3, kind: input, shape index: {}]
  %s4 = inlined_call_operand.vmem [shape: f32[1,64], index: 4, kind: input, shape index: {}]
  %s5 = inlined_call_operand.vmem [shape: bf16[64,20], index: 5, kind: input, shape index: {}]
  %s6 = inlined_call_operand.vmem [shape: f32[1,20], index: 6, kind: input, shape index: {}]
  %s7 = inlined_call_operand.hbm [shape: f32[32,20], index: 7, kind: output, shape index: {}]
  %s8 = sld [smem:[#allocation0]]
  $region38: #{_lambda_.19} parent=0
    _
  %s10 = ssub.s32 1, %s8
  %s11 = scalar_select 0, %s10, %s8
  $region1: #{_lambda_.19} parent=0
    #allocation2 [shape = 'u8[16384]{0}', space=vmem, size = 0x4000, scoped, tag = 'output window, operand 0, single buffered']
    #allocation3 [shape = 's32[1]{0}', space=sflag, size = 0x4, scoped, tag = 'scoped memory for _lambda_.19']
    %12 = vsyncpa [#allocation3], 0
    // Predicated region
    $region2: #{_lambda_.19} parent=1 // pred_check
      _
    $region3: #{_lambda_.19} parent=1 // pred_check_branch
      %14 = sbr.rel (0) target = $region5
    $region4: #{_lambda_.19} parent=1 // pred_region
      _
    $region5: #{_lambda_.19} parent=1 // pred_fallthru
      _
    // Predicated region
    $region6: #{_lambda_.19} parent=1 // pred_check
      _
    $region7: #{_lambda_.19} parent=1 // pred_check_branch
      %16 = sbr.rel (0) target = $region9
    $region8: #{_lambda_.19} parent=1 // pred_region
      _
    $region9: #{_lambda_.19} parent=1 // pred_fallthru
      _
    // Predicated region
    $region10: #{_lambda_.19} parent=1 // pred_check
      _
    $region11: #{_lambda_.19} parent=1 // pred_check_branch
      %18 = sbr.rel (0) target = $region13
    $region12: #{_lambda_.19} parent=1 // pred_region
      _
    $region13: #{_lambda_.19} parent=1 // pred_fallthru
      _
    // Predicated region
    $region14: #{_lambda_.19} parent=1 // pred_check
      _
    $region15: #{_lambda_.19} parent=1 // pred_check_branch
      %20 = sbr.rel (0) target = $region17
    $region16: #{_lambda_.19} parent=1 // pred_region
      _
    $region17: #{_lambda_.19} parent=1 // pred_fallthru
      _
    // Predicated region
    $region18: #{_lambda_.19} parent=1 // pred_check
      _
    $region19: #{_lambda_.19} parent=1 // pred_check_branch
      %22 = sbr.rel (0) target = $region21
    $region20: #{_lambda_.19} parent=1 // pred_region
      _
    $region21: #{_lambda_.19} parent=1 // pred_fallthru
      _
    // Predicated region
    $region22: #{_lambda_.19} parent=1 // pred_check
      _
    $region23: #{_lambda_.19} parent=1 // pred_check_branch
      %24 = sbr.rel (0) target = $region25
    $region24: #{_lambda_.19} parent=1 // pred_region
      _
    $region25: #{_lambda_.19} parent=1 // pred_fallthru
      _
    // Predicated region
    $region26: #{_lambda_.19} parent=1 // pred_check
      _
    $region27: #{_lambda_.19} parent=1 // pred_check_branch
      %26 = sbr.rel (0) target = $region29
    $region28: #{_lambda_.19} parent=1 // pred_region
      _
    $region29: #{_lambda_.19} parent=1 // pred_fallthru
      _
    %v28 = vld [vmem:[%s0] sm:$0xff]
    %v29 = vld [vmem:[%s0 + $0x8] sm:$0xff]
    %v30 = vld [vmem:[%s0 + $0x10] sm:$0xff]
    %v31 = vld [vmem:[%s0 + $0x18] sm:$0xff]
    %v32 = vld [vmem:[%s1] sm:$0x1]
    %v33 = vld [vmem:[%s2] sm:$0x1]
    %v34 = vld [vmem:[%s3] sm:$0x1]
    %v35 = vld [vmem:[%s4] sm:$0x1]
    %v36 = vmul.f32 %v32, 0.03125
    %v37 = vmul.f32 %v33, 0.03125
    %v38 = vmul.f32 %v36, %v36
    %v39 = vsub.f32 %v37, %v38
    %v40 = vmax.f32 %v39, 0.0
    %v41 = vadd.f32 %v40, 1e-05
    %v42 = vrsqrt.pop %v41
    %v43 = vmul.f32 %v42, %v41
    %v44 = vmul.f32 %v43, %v42
    %v45 = vmul.f32 0.5, %v44
    %v46 = vsub.f32 1.5, %v45
    %v47 = vmul.f32 %v42, %v46
    %vm48 = vweird.f32 %v41
    %vm49 = vweird.f32 %v42
    %vm50 = vmor %vm48, %vm49
    %v51 = vsel %vm50, %v42, %v47
    %v53 = vperm.slane %v36, 0
    %v55 = vsub.f32 %v28, %v53
    %v56 = vsub.f32 %v29, %v53
    %v57 = vsub.f32 %v30, %v53
    %v58 = vsub.f32 %v31, %v53
    %v59 = vmul.f32 %v51, %v34
    %v61 = vperm.slane %v59, 0
    %v63 = vmul.f32 %v55, %v61
    %v64 = vmul.f32 %v56, %v61
    %v65 = vmul.f32 %v57, %v61
    %v66 = vmul.f32 %v58, %v61
    %v68 = vperm.slane %v35, 0
    %v70 = vadd.f32 %v63, %v68
    %v71 = vadd.f32 %v64, %v68
    %v72 = vadd.f32 %v65, %v68
    %v73 = vadd.f32 %v66, %v68
    %v74 = vmax.f32 %v70, 0.0
    %v75 = vmax.f32 %v71, 0.0
    %v76 = vmax.f32 %v72, 0.0
    %v77 = vmax.f32 %v73, 0.0
    %v78 = vpack.c.bf16 %v75, %v74
    %v79 = vpack.c.bf16 %v77, %v76
    %v80 = vld [vmem:[%s5] sm:$0xf]
    %v81 = vld [vmem:[%s5 + $0x4] sm:$0xf]
    %v82 = vld [vmem:[%s5 + $0x8] sm:$0xf]
    %v83 = vld [vmem:[%s5 + $0xc] sm:$0xf]
    %v84 = vld [vmem:[%s5 + $0x10] sm:$0xf]
    %v85 = vld [vmem:[%s5 + $0x14] sm:$0xf]
    %v86 = vld [vmem:[%s5 + $0x18] sm:$0xf]
    %v87 = vld [vmem:[%s5 + $0x1c] sm:$0xf]
    %v88 = vld [vmem:[%s6] sm:$0x1]
    %v90 = vperm.slane %v88, 0
    %v100 = vunpack.c.l.b16 %v80
    %v101 = vunpack.c.l.b16 %v81
    %v102 = vunpack.c.l.b16 %v82
    %v103 = vunpack.c.l.b16 %v83
    %v104 = vunpack.c.l.b16 %v84
    %v105 = vunpack.c.l.b16 %v85
    %v106 = vunpack.c.l.b16 %v86
    %v107 = vunpack.c.l.b16 %v87
    %v108 = vpack.c.b16 %v101, %v100
    %v109 = vpack.c.b16 %v103, %v102
    %v110 = vpack.c.b16 %v105, %v104
    %v111 = vpack.c.b16 %v107, %v106
    %vm116 = vcmask 523264
    %v118 = vsel %vm116, %v78, 0
    %v121 = vsel %vm116, %v79, 0
    %123 = vmatpush.bf16.msra.mxu0 0
    %124 = vmatpush.bf16.msra.mxu0 0
    %125 = vmatpush.bf16.msra.mxu0 0
    %126 = vmatpush.bf16.msra.mxu0 0
    %127 = vmatpush.bf16.msra.mxu0 %v111
    %128 = vmatpush.bf16.msra.mxu0 %v110
    %129 = vmatpush.bf16.msra.mxu0 %v109
    %130 = vmatpush.bf16.msra.mxu0 %v108
    %131 = vmatmul.bf16.gmra.mxu0 %v118
    %v132 = vpop.f32.mrf.mxu0
    %v133 = vadd.f32 %v90, %v132
    %v134 = vpop.f32.mrf.mxu0
    %v135 = vadd.f32 %v90, %v134
    %136 = vmatmul.bf16.gmra.mxu0 %v121
    %v137 = vpop.f32.mrf.mxu0
    %v138 = vadd.f32 %v90, %v137
    %v139 = vpop.f32.mrf.mxu0
    %v140 = vadd.f32 %v90, %v139
    %141 = vdwg.mxu0
    %vm142 = vcmask 162816
    %143 = vst.msk [vmem:[#allocation2] sm:$0xff] %vm142, %v133
    %144 = vst.msk [vmem:[#allocation2 + $0x8] sm:$0xff] %vm142, %v135
    %145 = vst.msk [vmem:[#allocation2 + $0x10] sm:$0xff] %vm142, %v138
    %146 = vst.msk [vmem:[#allocation2 + $0x18] sm:$0xff] %vm142, %v140
    // Predicated region
    $region30: #{_lambda_.19} parent=1 // pred_check
      _
    $region31: #{_lambda_.19} parent=1 // pred_check_branch
      %148 = sbr.rel (0) target = $region33
    $region32: #{_lambda_.19} parent=1 // pred_region
      %150 = vsyncadd [#allocation3], 0
      %s151 = sshll.u32 [#allocation2], 4
      %s152 = int_to_ptr.vmem [resolvable:$true] %s151
      %s153 = sshll.u32 %s7, 4
      %s154 = int_to_ptr.hbm [resolvable:$true] %s153
      %159 = dma.vmem_to_hbm [thread:$0]  %s152, 512, %s154, [#allocation3], 128, 128, 8
    $region33: #{_lambda_.19} parent=1 // pred_fallthru
      _
    // Predicated region
    $region34: #{_lambda_.19} parent=1 // pred_check
      _
    $region35: #{_lambda_.19} parent=1 // pred_check_branch
      %161 = sbr.rel (0) target = $region37
    $region36: #{_lambda_.19} parent=1 // pred_region
      %163 = dma.done [#allocation3], 512
    $region37: #{_lambda_.19} parent=1 // pred_fallthru
      _
    %164 = vsyncpa [#allocation3], 1

</llo_original>
